<compile_context>
chip_gen: v7x
topology: tpu7x:2x2x1
jax: 0.10.0
libtpu: 0.0.40
codegen_flags: <defaults>
</compile_context>

<pallas_src>
import functools

import jax
import jax.numpy as jnp
from jax.experimental import pallas as pl
from jax.experimental.pallas import tpu as pltpu

ACT_DTYPE = jnp.bfloat16          # activations & weights; accumulation stays f32
_SQRT_HALF = 0.7071067811865476   # 1/sqrt(2) for exact (erf) GELU


# ------------------------------ small helpers ------------------------------

def _tile(dim, cap, align):
    """Largest block size <= cap that divides `dim` and is `align`-aligned,
    falling back to the full dimension (full-extent blocks are always legal)."""
    if dim <= cap:
        return dim
    t = (cap // align) * align
    while t >= align:
        if dim % t == 0:
            return t
        t -= align
    return dim


def _pick_head_group(n_head, d_head):
    """Smallest head-group G such that the attention tile last dim (G*d_head) is
    lane-dense (multiple of 128) and G divides n_head; otherwise all heads
    (block == full feature dim, always legal)."""
    for g in range(1, n_head + 1):
        if n_head % g == 0 and (g * d_head) % 128 == 0:
            return g
    return n_head


def _mosaic(sem):
    return pltpu.CompilerParams(
        dimension_semantics=tuple(sem),
        vmem_limit_bytes=32 * 1024 * 1024,
    )


def _ln_f32(x, g, b, eps=1e-5):
    xf = x.astype(jnp.float32)
    mean = jnp.mean(xf, axis=-1, keepdims=True)
    xc = xf - mean
    var = jnp.mean(xc * xc, axis=-1, keepdims=True)
    return xc * jax.lax.rsqrt(var + eps) * g.astype(jnp.float32) + b.astype(jnp.float32)


# ----------------------------- Pallas kernels ------------------------------

def _ln_qkv_kernel(x_ref, g_ref, b_ref, wq_ref, wk_ref, wv_ref,
                   q_ref, k_ref, v_ref, xn_ref):
    # Fused LayerNorm + the three attention input projections.  LN is computed
    # once per row tile (j == 0) and cached in VMEM for the remaining output
    # column tiles (grid axis 1 is "arbitrary" -> sequential, scratch persists).
    j = pl.program_id(1)

    @pl.when(j == 0)
    def _compute_ln():
        xn_ref[...] = _ln_f32(x_ref[...], g_ref[...], b_ref[...]).astype(xn_ref.dtype)

    xn = xn_ref[...]
    q_ref[...] = jnp.dot(xn, wq_ref[...],
                         preferred_element_type=jnp.float32).astype(q_ref.dtype)
    k_ref[...] = jnp.dot(xn, wk_ref[...],
                         preferred_element_type=jnp.float32).astype(k_ref.dtype)
    v_ref[...] = jnp.dot(xn, wv_ref[...],
                         preferred_element_type=jnp.float32).astype(v_ref.dtype)


def _attn_kernel(q_ref, k_ref, v_ref, o_ref, *, heads_per_block, d_head, scale):
    # q_ref: (1, T, G*dh), k_ref/v_ref: (1, S, G*dh); non-causal softmax attention.
    # Softmax scale folded into q (T*dh elements instead of T*S).
    q = (q_ref[0].astype(jnp.float32) * scale).astype(k_ref.dtype)
    k = k_ref[0]
    v = v_ref[0]
    outs = []
    for g in range(heads_per_block):          # short unrolled per-head loop
        sl = slice(g * d_head, (g + 1) * d_head)
        s = jax.lax.dot_general(q[:, sl], k[:, sl], (((1,), (1,)), ((), ())),
                                preferred_element_type=jnp.float32)   # (T, S)
        m = jnp.max(s, axis=-1, keepdims=True)
        p = jnp.exp(s - m)
        l = jnp.sum(p, axis=-1, keepdims=True)
        o = jnp.dot(p.astype(v.dtype), v[:, sl],
                    preferred_element_type=jnp.float32)
        o = o * pl.reciprocal(l, approx=True)                         # EUP, not VALU
        outs.append(o.astype(o_ref.dtype))
    # Single lane-dense store of the whole (T, G*dh) tile instead of G masked
    # narrow stores.
    out = outs[0] if heads_per_block == 1 else jnp.concatenate(outs, axis=-1)
    o_ref[0] = out


def _matmul_residual_kernel(x_ref, w_ref, res_ref, o_ref):
    # o = res + x @ w   (attention output projection with fused residual add)
    acc = jnp.dot(x_ref[...], w_ref[...], preferred_element_type=jnp.float32)
    o_ref[...] = (res_ref[...].astype(jnp.float32) + acc).astype(o_ref.dtype)


def _ln_mlp_kernel(x_ref, g_ref, b_ref, w1_ref, w2_ref, o_ref, acc_ref, xn_ref):
    # o = x + GELU(LN(x) @ w1) @ w2 ; hidden dim tiled on grid axis 1 (reduction).
    # LN computed once per row tile (j == 0) and cached; f32 accumulator in VMEM.
    j = pl.program_id(1)

    @pl.when(j == 0)
    def _init():
        acc_ref[...] = jnp.zeros_like(acc_ref)
        xn_ref[...] = _ln_f32(x_ref[...], g_ref[...], b_ref[...]).astype(xn_ref.dtype)

    h = jnp.dot(xn_ref[...], w1_ref[...], preferred_element_type=jnp.float32)
    h = 0.5 * h * (1.0 + jax.lax.erf(h * _SQRT_HALF))                 # exact GELU
    acc_ref[...] += jnp.dot(h.astype(w2_ref.dtype), w2_ref[...],
                            preferred_element_type=jnp.float32)

    @pl.when(j == pl.num_programs(1) - 1)
    def _finalize():
        o_ref[...] = (x_ref[...].astype(jnp.float32) + acc_ref[...]).astype(o_ref.dtype)


def _layernorm_kernel(x_ref, g_ref, b_ref, o_ref):
    o_ref[...] = _ln_f32(x_ref[...], g_ref[...], b_ref[...]).astype(o_ref.dtype)


# ------------------------------ thin wrappers -------------------------------

def ln_qkv_proj(x2d, gamma, beta, wq, wk, wv, *, tm_cap=256, tn_cap=512):
    M, D = x2d.shape
    tm = _tile(M, tm_cap, 8)
    tn = _tile(D, tn_cap, 128)
    g = gamma.reshape(1, D)
    b = beta.reshape(1, D)
    w_spec = pl.BlockSpec((D, tn), lambda i, j: (0, j))
    o_spec = pl.BlockSpec((tm, tn), lambda i, j: (i, j))
    o_shape = jax.ShapeDtypeStruct((M, D), x2d.dtype)
    return pl.pallas_call(
        _ln_qkv_kernel,
        out_shape=(o_shape, o_shape, o_shape),
        grid=(M // tm, D // tn),
        in_specs=[
            pl.BlockSpec((tm, D), lambda i, j: (i, 0)),
            pl.BlockSpec((1, D), lambda i, j: (0, 0)),
            pl.BlockSpec((1, D), lambda i, j: (0, 0)),
            w_spec, w_spec, w_spec,
        ],
        out_specs=(o_spec, o_spec, o_spec),
        scratch_shapes=[pltpu.VMEM((tm, D), ACT_DTYPE)],
        # axis 1 sequential so the cached LN scratch is valid across column tiles
        compiler_params=_mosaic(("parallel", "arbitrary")),
    )(x2d, g, b, wq, wk, wv)


def attention(q, k, v, n_head):
    # q/k/v: (B, T, D) in head-concatenated layout; no HBM transposes needed.
    B, T, D = q.shape
    S = k.shape[1]
    dh = D // n_head
    G = _pick_head_group(n_head, dh)
    n_hg = n_head // G
    kern = functools.partial(_attn_kernel, heads_per_block=G, d_head=dh,
                             scale=float(dh) ** -0.5)
    q_spec = pl.BlockSpec((1, T, G * dh), lambda bi, hi: (bi, 0, hi))
    kv_spec = pl.BlockSpec((1, S, G * dh), lambda bi, hi: (bi, 0, hi))
    return pl.pallas_call(
        kern,
        out_shape=jax.ShapeDtypeStruct((B, T, D), q.dtype),
        grid=(B, n_hg),
        in_specs=[q_spec, kv_spec, kv_spec],
        out_specs=pl.BlockSpec((1, T, G * dh), lambda bi, hi: (bi, 0, hi)),
        compiler_params=_mosaic(("parallel", "parallel")),
    )(q, k, v)


def out_proj_residual(x2d, w, res2d, *, tm_cap=256, tn_cap=512):
    M, K = x2d.shape
    N = w.shape[1]
    tm = _tile(M, tm_cap, 8)
    tn = _tile(N, tn_cap, 128)
    return pl.pallas_call(
        _matmul_residual_kernel,
        out_shape=jax.ShapeDtypeStruct((M, N), res2d.dtype),
        grid=(M // tm, N // tn),
        in_specs=[
            pl.BlockSpec((tm, K), lambda i, j: (i, 0)),
            pl.BlockSpec((K, tn), lambda i, j: (0, j)),
            pl.BlockSpec((tm, tn), lambda i, j: (i, j)),
        ],
        out_specs=pl.BlockSpec((tm, tn), lambda i, j: (i, j)),
        compiler_params=_mosaic(("parallel", "parallel")),
    )(x2d, w, res2d)


def ln_mlp_residual(x2d, gamma, beta, w1, w2, *, tm_cap=256, tdh_cap=512):
    M, D = x2d.shape
    Dh = w1.shape[1]
    tm = _tile(M, tm_cap, 8)
    tdh = _tile(Dh, tdh_cap, 128)
    g = gamma.reshape(1, D)
    b = beta.reshape(1, D)
    return pl.pallas_call(
        _ln_mlp_kernel,
        out_shape=jax.ShapeDtypeStruct((M, D), x2d.dtype),
        grid=(M // tm, Dh // tdh),                       # reduction axis last
        in_specs=[
            pl.BlockSpec((tm, D), lambda i, j: (i, 0)),
            pl.BlockSpec((1, D), lambda i, j: (0, 0)),
            pl.BlockSpec((1, D), lambda i, j: (0, 0)),
            pl.BlockSpec((D, tdh), lambda i, j: (0, j)),
            pl.BlockSpec((tdh, D), lambda i, j: (j, 0)),
        ],
        out_specs=pl.BlockSpec((tm, D), lambda i, j: (i, 0)),
        scratch_shapes=[pltpu.VMEM((tm, D), jnp.float32),
                        pltpu.VMEM((tm, D), ACT_DTYPE)],
        compiler_params=_mosaic(("parallel", "arbitrary")),
    )(x2d, g, b, w1, w2)


def layernorm(x2d, gamma, beta, *, out_dtype=None, tm_cap=512):
    M, D = x2d.shape
    tm = _tile(M, tm_cap, 8)
    g = gamma.reshape(1, D)
    b = beta.reshape(1, D)
    return pl.pallas_call(
        _layernorm_kernel,
        out_shape=jax.ShapeDtypeStruct((M, D), out_dtype or x2d.dtype),
        grid=(M // tm,),
        in_specs=[
            pl.BlockSpec((tm, D), lambda i: (i, 0)),
            pl.BlockSpec((1, D), lambda i: (0, 0)),
            pl.BlockSpec((1, D), lambda i: (0, 0)),
        ],
        out_specs=pl.BlockSpec((tm, D), lambda i: (i, 0)),
        compiler_params=_mosaic(("parallel",)),
    )(x2d, g, b)


# --------------------------- model composition -----------------------------

def residual_block(x2d, B, T, lp, n_head):
    D = x2d.shape[1]
    # Self-attention sub-block (mask=None in the reference forward -> not causal).
    # LN fused into the QKV kernel; residual add fused into the output projection.
    q, k, v = ln_qkv_proj(x2d, lp["attn_ln_g"], lp["attn_ln_b"],
                          lp["wq"], lp["wk"], lp["wv"])
    attn = attention(q.reshape(B, T, D), k.reshape(B, T, D), v.reshape(B, T, D),
                     n_head)
    x2d = out_proj_residual(attn.reshape(B * T, D), lp["wo"], x2d)
    # MLP sub-block: LN + Linear + GELU + Linear + residual in one kernel.
    x2d = ln_mlp_residual(x2d, lp["mlp_ln_g"], lp["mlp_ln_b"], lp["w1"], lp["w2"])
    return x2d


def text_encoder_forward(tokens, params, *, n_head):
    B, T = tokens.shape
    D = params["tok_emb"].shape[1]
    # token + positional embedding (plain-JAX gather/add; glue)
    x = params["tok_emb"][tokens] + params["pos_emb"][:T]
    x2d = x.astype(ACT_DTYPE).reshape(B * T, D)
    for lp in params["layers"]:
        x2d = residual_block(x2d, B, T, lp, n_head)
    out = layernorm(x2d, params["ln_g"], params["ln_b"], out_dtype=jnp.float32)
    return out.reshape(B, T, D)


# ------------------------------- init / main --------------------------------

def init_params(key, n_vocab, n_ctx, n_state, n_layer, dtype=ACT_DTYPE):
    # All linears are bias-free in the reference module (bias=False everywhere).
    # Weights stored pre-transposed as (in_features, out_features) = W.T (bf16).
    def nrm(k, shape, scale=0.02):
        return scale * jax.random.normal(k, shape, dtype=jnp.float32)

    keys = jax.random.split(key, 2 + n_layer)
    params = {
        "tok_emb": nrm(keys[0], (n_vocab, n_state)),
        "pos_emb": nrm(keys[1], (n_ctx, n_state)),
        "ln_g": jnp.ones((n_state,), jnp.float32),
        "ln_b": jnp.zeros((n_state,), jnp.float32),
        "layers": [],
    }
    D, Dh = n_state, 4 * n_state
    for li in range(n_layer):
        lk = jax.random.split(keys[2 + li], 6)
        lp = {
            "wq": nrm(lk[0], (D, D)).astype(dtype),
            "wk": nrm(lk[1], (D, D)).astype(dtype),
            "wv": nrm(lk[2], (D, D)).astype(dtype),
            "wo": nrm(lk[3], (D, D)).astype(dtype),
            "attn_ln_g": jnp.ones((D,), jnp.float32),
            "attn_ln_b": jnp.zeros((D,), jnp.float32),
            "w1": nrm(lk[4], (D, Dh)).astype(dtype),
            "w2": nrm(lk[5], (Dh, D)).astype(dtype),
            "mlp_ln_g": jnp.ones((D,), jnp.float32),
            "mlp_ln_b": jnp.zeros((D,), jnp.float32),
        }
        params["layers"].append(lp)
    return params


if __name__ == "__main__":
    # small shapes consistent with the module
    n_vocab, n_ctx, n_state, n_head, n_layer = 64, 16, 32, 4, 2
    batch, seq_len = 2, 8

    key = jax.random.PRNGKey(0)
    k_tok, k_param = jax.random.split(key)

    tokens = jax.random.randint(k_tok, (batch, seq_len), 0, n_vocab, dtype=jnp.int32)
    params = init_params(k_param, n_vocab, n_ctx, n_state, n_layer)

    fwd = jax.jit(functools.partial(text_encoder_forward, n_head=n_head))
    out = jax.block_until_ready(fwd(tokens, params))

    assert out.shape == (batch, seq_len, n_state)
    assert bool(jnp.all(jnp.isfinite(out)))
    print("KERNEL_OK")
</pallas_src>

<mosaic_0001>
module attributes {stable_mosaic.version = 11 : i64} {
  func.func @_ln_qkv_kernel(%arg0: i32, %arg1: i32, %arg2: memref<16x32xbf16, #tpu.memory_space<vmem>>, %arg3: memref<1x32xf32, #tpu.memory_space<vmem>>, %arg4: memref<1x32xf32, #tpu.memory_space<vmem>>, %arg5: memref<32x32xbf16, #tpu.memory_space<vmem>>, %arg6: memref<32x32xbf16, #tpu.memory_space<vmem>>, %arg7: memref<32x32xbf16, #tpu.memory_space<vmem>>, %arg8: memref<16x32xbf16, #tpu.memory_space<vmem>>, %arg9: memref<16x32xbf16, #tpu.memory_space<vmem>>, %arg10: memref<16x32xbf16, #tpu.memory_space<vmem>>, %arg11: memref<16x32xbf16, #tpu.memory_space<vmem>>) attributes {dimension_semantics = [#tpu.dimension_semantics<parallel>, #tpu.dimension_semantics<arbitrary>], iteration_bounds = array<i64: 1, 1>, scalar_prefetch = 0 : i64, scratch_operands = 1 : i64, tpu.core_type = #tpu.core_type<tc>, window_params = [{transform_indices = @transform_0, window_bounds = array<i64: 16, 32>}, {pipeline_mode = #tpu.pipeline_mode<synchronous>, transform_indices = @transform_1, window_bounds = array<i64: 1, 32>}, {pipeline_mode = #tpu.pipeline_mode<synchronous>, transform_indices = @transform_2, window_bounds = array<i64: 1, 32>}, {transform_indices = @transform_3, window_bounds = array<i64: 32, 32>}, {transform_indices = @transform_4, window_bounds = array<i64: 32, 32>}, {transform_indices = @transform_5, window_bounds = array<i64: 32, 32>}, {transform_indices = @transform_6, window_bounds = array<i64: 16, 32>}, {transform_indices = @transform_7, window_bounds = array<i64: 16, 32>}, {transform_indices = @transform_8, window_bounds = array<i64: 16, 32>}]} {
    %c0_i32 = arith.constant 0 : i32
    %0 = arith.cmpi eq, %arg1, %c0_i32 : i32
    %1 = arith.extui %0 : i1 to i32
    %c0_i32_0 = arith.constant 0 : i32
    %2 = arith.cmpi ne, %1, %c0_i32_0 : i32
    scf.if %2 {
      %c0_16 = arith.constant 0 : index
      %c0_17 = arith.constant 0 : index
      %16 = vector.load %arg2[%c0_16, %c0_17] : memref<16x32xbf16, #tpu.memory_space<vmem>>, vector<16x32xbf16>
      %c0_18 = arith.constant 0 : index
      %c0_19 = arith.constant 0 : index
      %17 = vector.load %arg3[%c0_18, %c0_19] : memref<1x32xf32, #tpu.memory_space<vmem>>, vector<1x32xf32>
      %c0_20 = arith.constant 0 : index
      %c0_21 = arith.constant 0 : index
      %18 = vector.load %arg4[%c0_20, %c0_21] : memref<1x32xf32, #tpu.memory_space<vmem>>, vector<1x32xf32>
      %19 = arith.extf %16 : vector<16x32xbf16> to vector<16x32xf32>
      %cst_22 = arith.constant dense<0.000000e+00> : vector<16xf32>
      %20 = vector.multi_reduction <add>, %19, %cst_22 [1] : vector<16x32xf32> to vector<16xf32>
      %21 = vector.shape_cast %20 : vector<16xf32> to vector<16x1xf32>
      %cst_23 = arith.constant 3.200000e+01 : f32
      %22 = vector.broadcast %cst_23 : f32 to vector<16x1xf32>
      %23 = arith.divf %21, %22 : vector<16x1xf32>
      %24 = vector.broadcast %23 : vector<16x1xf32> to vector<16x32xf32>
      %25 = arith.subf %19, %24 : vector<16x32xf32>
      %26 = arith.mulf %25, %25 : vector<16x32xf32>
      %cst_24 = arith.constant dense<0.000000e+00> : vector<16xf32>
      %27 = vector.multi_reduction <add>, %26, %cst_24 [1] : vector<16x32xf32> to vector<16xf32>
      %28 = vector.shape_cast %27 : vector<16xf32> to vector<16x1xf32>
      %cst_25 = arith.constant 3.200000e+01 : f32
      %29 = vector.broadcast %cst_25 : f32 to vector<16x1xf32>
      %30 = arith.divf %28, %29 : vector<16x1xf32>
      %cst_26 = arith.constant 9.99999974E-6 : f32
      %31 = vector.broadcast %cst_26 : f32 to vector<16x1xf32>
      %32 = arith.addf %30, %31 : vector<16x1xf32>
      %33 = math.rsqrt %32 : vector<16x1xf32>
      %34 = vector.broadcast %33 : vector<16x1xf32> to vector<16x32xf32>
      %35 = arith.mulf %25, %34 : vector<16x32xf32>
      %36 = vector.broadcast %17 : vector<1x32xf32> to vector<16x32xf32>
      %37 = arith.mulf %35, %36 : vector<16x32xf32>
      %38 = vector.broadcast %18 : vector<1x32xf32> to vector<16x32xf32>
      %39 = arith.addf %37, %38 : vector<16x32xf32>
      %40 = arith.truncf %39 : vector<16x32xf32> to vector<16x32xbf16>
      %c0_27 = arith.constant 0 : index
      %c0_28 = arith.constant 0 : index
      %41 = vector.load %arg11[%c0_27, %c0_28] : memref<16x32xbf16, #tpu.memory_space<vmem>>, vector<16x32xbf16>
      tpu.vector_store %arg11[%c0_27, %c0_28], %40 {strides = array<i32>} : memref<16x32xbf16, #tpu.memory_space<vmem>>, vector<16x32xbf16>,
    } else {
    }
    %c0 = arith.constant 0 : index
    %c0_1 = arith.constant 0 : index
    %3 = vector.load %arg11[%c0, %c0_1] : memref<16x32xbf16, #tpu.memory_space<vmem>>, vector<16x32xbf16>
    %c0_2 = arith.constant 0 : index
    %c0_3 = arith.constant 0 : index
    %4 = vector.load %arg5[%c0_2, %c0_3] : memref<32x32xbf16, #tpu.memory_space<vmem>>, vector<32x32xbf16>
    %cst = arith.constant dense<0.000000e+00> : vector<16x32xf32>
    %5 = tpu.matmul %3, %4, %cst {dimension_numbers = #tpu.dot_dimension_numbers<[1], [0], [0], [1], [0, 0, 1, 1], [], []>} : vector<16x32xbf16>, vector<32x32xbf16>, vector<16x32xf32> -> vector<16x32xf32>
    %6 = arith.truncf %5 : vector<16x32xf32> to vector<16x32xbf16>
    %c0_4 = arith.constant 0 : index
    %c0_5 = arith.constant 0 : index
    %7 = vector.load %arg8[%c0_4, %c0_5] : memref<16x32xbf16, #tpu.memory_space<vmem>>, vector<16x32xbf16>
    tpu.vector_store %arg8[%c0_4, %c0_5], %6 {strides = array<i32>} : memref<16x32xbf16, #tpu.memory_space<vmem>>, vector<16x32xbf16>,
    %c0_6 = arith.constant 0 : index
    %c0_7 = arith.constant 0 : index
    %8 = vector.load %arg6[%c0_6, %c0_7] : memref<32x32xbf16, #tpu.memory_space<vmem>>, vector<32x32xbf16>
    %cst_8 = arith.constant dense<0.000000e+00> : vector<16x32xf32>
    %9 = tpu.matmul %3, %8, %cst_8 {dimension_numbers = #tpu.dot_dimension_numbers<[1], [0], [0], [1], [0, 0, 1, 1], [], []>} : vector<16x32xbf16>, vector<32x32xbf16>, vector<16x32xf32> -> vector<16x32xf32>
    %10 = arith.truncf %9 : vector<16x32xf32> to vector<16x32xbf16>
    %c0_9 = arith.constant 0 : index
    %c0_10 = arith.constant 0 : index
    %11 = vector.load %arg9[%c0_9, %c0_10] : memref<16x32xbf16, #tpu.memory_space<vmem>>, vector<16x32xbf16>
    tpu.vector_store %arg9[%c0_9, %c0_10], %10 {strides = array<i32>} : memref<16x32xbf16, #tpu.memory_space<vmem>>, vector<16x32xbf16>,
    %c0_11 = arith.constant 0 : index
    %c0_12 = arith.constant 0 : index
    %12 = vector.load %arg7[%c0_11, %c0_12] : memref<32x32xbf16, #tpu.memory_space<vmem>>, vector<32x32xbf16>
    %cst_13 = arith.constant dense<0.000000e+00> : vector<16x32xf32>
    %13 = tpu.matmul %3, %12, %cst_13 {dimension_numbers = #tpu.dot_dimension_numbers<[1], [0], [0], [1], [0, 0, 1, 1], [], []>} : vector<16x32xbf16>, vector<32x32xbf16>, vector<16x32xf32> -> vector<16x32xf32>
    %14 = arith.truncf %13 : vector<16x32xf32> to vector<16x32xbf16>
    %c0_14 = arith.constant 0 : index
    %c0_15 = arith.constant 0 : index
    %15 = vector.load %arg10[%c0_14, %c0_15] : memref<16x32xbf16, #tpu.memory_space<vmem>>, vector<16x32xbf16>
    tpu.vector_store %arg10[%c0_14, %c0_15], %14 {strides = array<i32>} : memref<16x32xbf16, #tpu.memory_space<vmem>>, vector<16x32xbf16>,
    return
  }
  func.func @transform_0(%arg0: i32, %arg1: i32) -> (i32, i32) {
    %c0_i32 = arith.constant 0 : i32
    %c0_i32_0 = arith.constant 0 : i32
    return %arg0, %c0_i32 : i32, i32
  }
  func.func @transform_1(%arg0: i32, %arg1: i32) -> (i32, i32) {
    %c0_i32 = arith.constant 0 : i32
    %c0_i32_0 = arith.constant 0 : i32
    %c0_i32_1 = arith.constant 0 : i32
    return %c0_i32, %c0_i32_0 : i32, i32
  }
  func.func @transform_2(%arg0: i32, %arg1: i32) -> (i32, i32) {
    %c0_i32 = arith.constant 0 : i32
    %c0_i32_0 = arith.constant 0 : i32
    %c0_i32_1 = arith.constant 0 : i32
    return %c0_i32, %c0_i32_0 : i32, i32
  }
  func.func @transform_3(%arg0: i32, %arg1: i32) -> (i32, i32) {
    %c0_i32 = arith.constant 0 : i32
    %c0_i32_0 = arith.constant 0 : i32
    return %c0_i32, %arg1 : i32, i32
  }
  func.func @transform_4(%arg0: i32, %arg1: i32) -> (i32, i32) {
    %c0_i32 = arith.constant 0 : i32
    %c0_i32_0 = arith.constant 0 : i32
    return %c0_i32, %arg1 : i32, i32
  }
  func.func @transform_5(%arg0: i32, %arg1: i32) -> (i32, i32) {
    %c0_i32 = arith.constant 0 : i32
    %c0_i32_0 = arith.constant 0 : i32
    return %c0_i32, %arg1 : i32, i32
  }
  func.func @transform_6(%arg0: i32, %arg1: i32) -> (i32, i32) {
    %c0_i32 = arith.constant 0 : i32
    return %arg0, %arg1 : i32, i32
  }
  func.func @transform_7(%arg0: i32, %arg1: i32) -> (i32, i32) {
    %c0_i32 = arith.constant 0 : i32
    return %arg0, %arg1 : i32, i32
  }
  func.func @transform_8(%arg0: i32, %arg1: i32) -> (i32, i32) {
    %c0_i32 = arith.constant 0 : i32
    return %arg0, %arg1 : i32, i32
  }
}

module attributes {stable_mosaic.version = 11 : i64} {
  func.func @_matmul_residual_kernel(%arg0: i32, %arg1: i32, %arg2: memref<16x32xbf16, #tpu.memory_space<vmem>>, %arg3: memref<32x32xbf16, #tpu.memory_space<vmem>>, %arg4: memref<16x32xbf16, #tpu.memory_space<vmem>>, %arg5: memref<16x32xbf16, #tpu.memory_space<vmem>>) attributes {dimension_semantics = [#tpu.dimension_semantics<parallel>, #tpu.dimension_semantics<parallel>], iteration_bounds = array<i64: 1, 1>, scalar_prefetch = 0 : i64, scratch_operands = 0 : i64, tpu.core_type = #tpu.core_type<tc>, window_params = [{transform_indices = @transform_0, window_bounds = array<i64: 16, 32>}, {transform_indices = @transform_1, window_bounds = array<i64: 32, 32>}, {transform_indices = @transform_2, window_bounds = array<i64: 16, 32>}, {transform_indices = @transform_3, window_bounds = array<i64: 16, 32>}]} {
    %c0 = arith.constant 0 : index
    %c0_0 = arith.constant 0 : index
    %0 = vector.load %arg2[%c0, %c0_0] : memref<16x32xbf16, #tpu.memory_space<vmem>>, vector<16x32xbf16>
    %c0_1 = arith.constant 0 : index
    %c0_2 = arith.constant 0 : index
    %1 = vector.load %arg3[%c0_1, %c0_2] : memref<32x32xbf16, #tpu.memory_space<vmem>>, vector<32x32xbf16>
    %cst = arith.constant dense<0.000000e+00> : vector<16x32xf32>
    %2 = tpu.matmul %0, %1, %cst {dimension_numbers = #tpu.dot_dimension_numbers<[1], [0], [0], [1], [0, 0, 1, 1], [], []>} : vector<16x32xbf16>, vector<32x32xbf16>, vector<16x32xf32> -> vector<16x32xf32>
    %c0_3 = arith.constant 0 : index
    %c0_4 = arith.constant 0 : index
    %3 = vector.load %arg4[%c0_3, %c0_4] : memref<16x32xbf16, #tpu.memory_space<vmem>>, vector<16x32xbf16>
    %4 = arith.extf %3 : vector<16x32xbf16> to vector<16x32xf32>
    %5 = arith.addf %4, %2 : vector<16x32xf32>
    %6 = arith.truncf %5 : vector<16x32xf32> to vector<16x32xbf16>
    %c0_5 = arith.constant 0 : index
    %c0_6 = arith.constant 0 : index
    %7 = vector.load %arg5[%c0_5, %c0_6] : memref<16x32xbf16, #tpu.memory_space<vmem>>, vector<16x32xbf16>
    tpu.vector_store %arg5[%c0_5, %c0_6], %6 {strides = array<i32>} : memref<16x32xbf16, #tpu.memory_space<vmem>>, vector<16x32xbf16>,
    return
  }
  func.func @transform_0(%arg0: i32, %arg1: i32) -> (i32, i32) {
    %c0_i32 = arith.constant 0 : i32
    %c0_i32_0 = arith.constant 0 : i32
    return %arg0, %c0_i32 : i32, i32
  }
  func.func @transform_1(%arg0: i32, %arg1: i32) -> (i32, i32) {
    %c0_i32 = arith.constant 0 : i32
    %c0_i32_0 = arith.constant 0 : i32
    return %c0_i32, %arg1 : i32, i32
  }
  func.func @transform_2(%arg0: i32, %arg1: i32) -> (i32, i32) {
    %c0_i32 = arith.constant 0 : i32
    return %arg0, %arg1 : i32, i32
  }
  func.func @transform_3(%arg0: i32, %arg1: i32) -> (i32, i32) {
    %c0_i32 = arith.constant 0 : i32
    return %arg0, %arg1 : i32, i32
  }
}

module attributes {stable_mosaic.version = 11 : i64} {
  func.func @_attn_kernel(%arg0: i32, %arg1: i32, %arg2: memref<1x8x32xbf16, #tpu.memory_space<vmem>>, %arg3: memref<1x8x32xbf16, #tpu.memory_space<vmem>>, %arg4: memref<1x8x32xbf16, #tpu.memory_space<vmem>>, %arg5: memref<1x8x32xbf16, #tpu.memory_space<vmem>>) attributes {dimension_semantics = [#tpu.dimension_semantics<parallel>, #tpu.dimension_semantics<parallel>], iteration_bounds = array<i64: 2, 1>, scalar_prefetch = 0 : i64, scratch_operands = 0 : i64, tpu.core_type = #tpu.core_type<tc>, window_params = [{transform_indices = @transform_0, window_bounds = array<i64: 1, 8, 32>}, {transform_indices = @transform_1, window_bounds = array<i64: 1, 8, 32>}, {transform_indices = @transform_2, window_bounds = array<i64: 1, 8, 32>}, {transform_indices = @transform_3, window_bounds = array<i64: 1, 8, 32>}]} {
    %c0 = arith.constant 0 : index
    %c0_0 = arith.constant 0 : index
    %c0_1 = arith.constant 0 : index
    %0 = vector.load %arg2[%c0, %c0_0, %c0_1] : memref<1x8x32xbf16, #tpu.memory_space<vmem>>, vector<1x8x32xbf16>
    %1 = vector.shape_cast %0 : vector<1x8x32xbf16> to vector<8x32xbf16>
    %2 = arith.extf %1 : vector<8x32xbf16> to vector<8x32xf32>
    %cst = arith.constant 0.353553385 : f32
    %3 = vector.broadcast %cst : f32 to vector<8x32xf32>
    %4 = arith.mulf %2, %3 : vector<8x32xf32>
    %5 = arith.truncf %4 : vector<8x32xf32> to vector<8x32xbf16>
    %c0_2 = arith.constant 0 : index
    %c0_3 = arith.constant 0 : index
    %c0_4 = arith.constant 0 : index
    %6 = vector.load %arg3[%c0_2, %c0_3, %c0_4] : memref<1x8x32xbf16, #tpu.memory_space<vmem>>, vector<1x8x32xbf16>
    %7 = vector.shape_cast %6 : vector<1x8x32xbf16> to vector<8x32xbf16>
    %c0_5 = arith.constant 0 : index
    %c0_6 = arith.constant 0 : index
    %c0_7 = arith.constant 0 : index
    %8 = vector.load %arg4[%c0_5, %c0_6, %c0_7] : memref<1x8x32xbf16, #tpu.memory_space<vmem>>, vector<1x8x32xbf16>
    %9 = vector.shape_cast %8 : vector<1x8x32xbf16> to vector<8x32xbf16>
    %10 = vector.extract_strided_slice %5 {offsets = [0, 0], sizes = [8, 8], strides = [1, 1]} : vector<8x32xbf16> to vector<8x8xbf16>
    %11 = vector.extract_strided_slice %7 {offsets = [0, 0], sizes = [8, 8], strides = [1, 1]} : vector<8x32xbf16> to vector<8x8xbf16>
    %cst_8 = arith.constant dense<0.000000e+00> : vector<8x8xf32>
    %12 = tpu.matmul %10, %11, %cst_8 {dimension_numbers = #tpu.dot_dimension_numbers<[1], [1], [0], [0], [0, 0, 1, 0], [], []>} : vector<8x8xbf16>, vector<8x8xbf16>, vector<8x8xf32> -> vector<8x8xf32>
    %cst_9 = arith.constant dense<0xFF800000> : vector<8xf32>
    %13 = vector.multi_reduction <maximumf>, %12, %cst_9 [1] : vector<8x8xf32> to vector<8xf32>
    %14 = vector.shape_cast %13 : vector<8xf32> to vector<8x1xf32>
    %15 = vector.broadcast %14 : vector<8x1xf32> to vector<8x8xf32>
    %16 = arith.subf %12, %15 : vector<8x8xf32>
    %17 = math.exp %16 : vector<8x8xf32>
    %cst_10 = arith.constant dense<0.000000e+00> : vector<8xf32>
    %18 = vector.multi_reduction <add>, %17, %cst_10 [1] : vector<8x8xf32> to vector<8xf32>
    %19 = vector.shape_cast %18 : vector<8xf32> to vector<8x1xf32>
    %20 = arith.truncf %17 : vector<8x8xf32> to vector<8x8xbf16>
    %21 = vector.extract_strided_slice %9 {offsets = [0, 0], sizes = [8, 8], strides = [1, 1]} : vector<8x32xbf16> to vector<8x8xbf16>
    %cst_11 = arith.constant dense<0.000000e+00> : vector<8x8xf32>
    %22 = tpu.matmul %20, %21, %cst_11 {dimension_numbers = #tpu.dot_dimension_numbers<[1], [0], [0], [1], [0, 0, 1, 1], [], []>} : vector<8x8xbf16>, vector<8x8xbf16>, vector<8x8xf32> -> vector<8x8xf32>
    %23 = tpu.reciprocal %19 {approx = true} : vector<8x1xf32> -> vector<8x1xf32>
    %24 = vector.broadcast %23 : vector<8x1xf32> to vector<8x8xf32>
    %25 = arith.mulf %22, %24 : vector<8x8xf32>
    %26 = arith.truncf %25 : vector<8x8xf32> to vector<8x8xbf16>
    %27 = vector.extract_strided_slice %5 {offsets = [0, 8], sizes = [8, 8], strides = [1, 1]} : vector<8x32xbf16> to vector<8x8xbf16>
    %28 = vector.extract_strided_slice %7 {offsets = [0, 8], sizes = [8, 8], strides = [1, 1]} : vector<8x32xbf16> to vector<8x8xbf16>
    %cst_12 = arith.constant dense<0.000000e+00> : vector<8x8xf32>
    %29 = tpu.matmul %27, %28, %cst_12 {dimension_numbers = #tpu.dot_dimension_numbers<[1], [1], [0], [0], [0, 0, 1, 0], [], []>} : vector<8x8xbf16>, vector<8x8xbf16>, vector<8x8xf32> -> vector<8x8xf32>
    %cst_13 = arith.constant dense<0xFF800000> : vector<8xf32>
    %30 = vector.multi_reduction <maximumf>, %29, %cst_13 [1] : vector<8x8xf32> to vector<8xf32>
    %31 = vector.shape_cast %30 : vector<8xf32> to vector<8x1xf32>
    %32 = vector.broadcast %31 : vector<8x1xf32> to vector<8x8xf32>
    %33 = arith.subf %29, %32 : vector<8x8xf32>
    %34 = math.exp %33 : vector<8x8xf32>
    %cst_14 = arith.constant dense<0.000000e+00> : vector<8xf32>
    %35 = vector.multi_reduction <add>, %34, %cst_14 [1] : vector<8x8xf32> to vector<8xf32>
    %36 = vector.shape_cast %35 : vector<8xf32> to vector<8x1xf32>
    %37 = arith.truncf %34 : vector<8x8xf32> to vector<8x8xbf16>
    %38 = vector.extract_strided_slice %9 {offsets = [0, 8], sizes = [8, 8], strides = [1, 1]} : vector<8x32xbf16> to vector<8x8xbf16>
    %cst_15 = arith.constant dense<0.000000e+00> : vector<8x8xf32>
    %39 = tpu.matmul %37, %38, %cst_15 {dimension_numbers = #tpu.dot_dimension_numbers<[1], [0], [0], [1], [0, 0, 1, 1], [], []>} : vector<8x8xbf16>, vector<8x8xbf16>, vector<8x8xf32> -> vector<8x8xf32>
    %40 = tpu.reciprocal %36 {approx = true} : vector<8x1xf32> -> vector<8x1xf32>
    %41 = vector.broadcast %40 : vector<8x1xf32> to vector<8x8xf32>
    %42 = arith.mulf %39, %41 : vector<8x8xf32>
    %43 = arith.truncf %42 : vector<8x8xf32> to vector<8x8xbf16>
    %44 = vector.extract_strided_slice %5 {offsets = [0, 16], sizes = [8, 8], strides = [1, 1]} : vector<8x32xbf16> to vector<8x8xbf16>
    %45 = vector.extract_strided_slice %7 {offsets = [0, 16], sizes = [8, 8], strides = [1, 1]} : vector<8x32xbf16> to vector<8x8xbf16>
    %cst_16 = arith.constant dense<0.000000e+00> : vector<8x8xf32>
    %46 = tpu.matmul %44, %45, %cst_16 {dimension_numbers = #tpu.dot_dimension_numbers<[1], [1], [0], [0], [0, 0, 1, 0], [], []>} : vector<8x8xbf16>, vector<8x8xbf16>, vector<8x8xf32> -> vector<8x8xf32>
    %cst_17 = arith.constant dense<0xFF800000> : vector<8xf32>
    %47 = vector.multi_reduction <maximumf>, %46, %cst_17 [1] : vector<8x8xf32> to vector<8xf32>
    %48 = vector.shape_cast %47 : vector<8xf32> to vector<8x1xf32>
    %49 = vector.broadcast %48 : vector<8x1xf32> to vector<8x8xf32>
    %50 = arith.subf %46, %49 : vector<8x8xf32>
    %51 = math.exp %50 : vector<8x8xf32>
    %cst_18 = arith.constant dense<0.000000e+00> : vector<8xf32>
    %52 = vector.multi_reduction <add>, %51, %cst_18 [1] : vector<8x8xf32> to vector<8xf32>
    %53 = vector.shape_cast %52 : vector<8xf32> to vector<8x1xf32>
    %54 = arith.truncf %51 : vector<8x8xf32> to vector<8x8xbf16>
    %55 = vector.extract_strided_slice %9 {offsets = [0, 16], sizes = [8, 8], strides = [1, 1]} : vector<8x32xbf16> to vector<8x8xbf16>
    %cst_19 = arith.constant dense<0.000000e+00> : vector<8x8xf32>
    %56 = tpu.matmul %54, %55, %cst_19 {dimension_numbers = #tpu.dot_dimension_numbers<[1], [0], [0], [1], [0, 0, 1, 1], [], []>} : vector<8x8xbf16>, vector<8x8xbf16>, vector<8x8xf32> -> vector<8x8xf32>
    %57 = tpu.reciprocal %53 {approx = true} : vector<8x1xf32> -> vector<8x1xf32>
    %58 = vector.broadcast %57 : vector<8x1xf32> to vector<8x8xf32>
    %59 = arith.mulf %56, %58 : vector<8x8xf32>
    %60 = arith.truncf %59 : vector<8x8xf32> to vector<8x8xbf16>
    %61 = vector.extract_strided_slice %5 {offsets = [0, 24], sizes = [8, 8], strides = [1, 1]} : vector<8x32xbf16> to vector<8x8xbf16>
    %62 = vector.extract_strided_slice %7 {offsets = [0, 24], sizes = [8, 8], strides = [1, 1]} : vector<8x32xbf16> to vector<8x8xbf16>
    %cst_20 = arith.constant dense<0.000000e+00> : vector<8x8xf32>
    %63 = tpu.matmul %61, %62, %cst_20 {dimension_numbers = #tpu.dot_dimension_numbers<[1], [1], [0], [0], [0, 0, 1, 0], [], []>} : vector<8x8xbf16>, vector<8x8xbf16>, vector<8x8xf32> -> vector<8x8xf32>
    %cst_21 = arith.constant dense<0xFF800000> : vector<8xf32>
    %64 = vector.multi_reduction <maximumf>, %63, %cst_21 [1] : vector<8x8xf32> to vector<8xf32>
    %65 = vector.shape_cast %64 : vector<8xf32> to vector<8x1xf32>
    %66 = vector.broadcast %65 : vector<8x1xf32> to vector<8x8xf32>
    %67 = arith.subf %63, %66 : vector<8x8xf32>
    %68 = math.exp %67 : vector<8x8xf32>
    %cst_22 = arith.constant dense<0.000000e+00> : vector<8xf32>
    %69 = vector.multi_reduction <add>, %68, %cst_22 [1] : vector<8x8xf32> to vector<8xf32>
    %70 = vector.shape_cast %69 : vector<8xf32> to vector<8x1xf32>
    %71 = arith.truncf %68 : vector<8x8xf32> to vector<8x8xbf16>
    %72 = vector.extract_strided_slice %9 {offsets = [0, 24], sizes = [8, 8], strides = [1, 1]} : vector<8x32xbf16> to vector<8x8xbf16>
    %cst_23 = arith.constant dense<0.000000e+00> : vector<8x8xf32>
    %73 = tpu.matmul %71, %72, %cst_23 {dimension_numbers = #tpu.dot_dimension_numbers<[1], [0], [0], [1], [0, 0, 1, 1], [], []>} : vector<8x8xbf16>, vector<8x8xbf16>, vector<8x8xf32> -> vector<8x8xf32>
    %74 = tpu.reciprocal %70 {approx = true} : vector<8x1xf32> -> vector<8x1xf32>
    %75 = vector.broadcast %74 : vector<8x1xf32> to vector<8x8xf32>
    %76 = arith.mulf %73, %75 : vector<8x8xf32>
    %77 = arith.truncf %76 : vector<8x8xf32> to vector<8x8xbf16>
    %78 = tpu.concatenate %26, %43, %60, %77 in 1 : vector<8x8xbf16>, vector<8x8xbf16>, vector<8x8xbf16>, vector<8x8xbf16> -> vector<8x32xbf16>
    %c0_24 = arith.constant 0 : index
    %c0_25 = arith.constant 0 : index
    %c0_26 = arith.constant 0 : index
    %79 = vector.load %arg5[%c0_24, %c0_25, %c0_26] : memref<1x8x32xbf16, #tpu.memory_space<vmem>>, vector<1x8x32xbf16>
    %80 = vector.shape_cast %79 : vector<1x8x32xbf16> to vector<8x32xbf16>
    %81 = vector.shape_cast %78 : vector<8x32xbf16> to vector<1x8x32xbf16>
    tpu.vector_store %arg5[%c0_24, %c0_25, %c0_26], %81 {strides = array<i32>} : memref<1x8x32xbf16, #tpu.memory_space<vmem>>, vector<1x8x32xbf16>,
    return
  }
  func.func @transform_0(%arg0: i32, %arg1: i32) -> (i32, i32, i32) {
    %c0_i32 = arith.constant 0 : i32
    %c0_i32_0 = arith.constant 0 : i32
    return %arg0, %c0_i32, %arg1 : i32, i32, i32
  }
  func.func @transform_1(%arg0: i32, %arg1: i32) -> (i32, i32, i32) {
    %c0_i32 = arith.constant 0 : i32
    %c0_i32_0 = arith.constant 0 : i32
    return %arg0, %c0_i32, %arg1 : i32, i32, i32
  }
  func.func @transform_2(%arg0: i32, %arg1: i32) -> (i32, i32, i32) {
    %c0_i32 = arith.constant 0 : i32
    %c0_i32_0 = arith.constant 0 : i32
    return %arg0, %c0_i32, %arg1 : i32, i32, i32
  }
  func.func @transform_3(%arg0: i32, %arg1: i32) -> (i32, i32, i32) {
    %c0_i32 = arith.constant 0 : i32
    %c0_i32_0 = arith.constant 0 : i32
    return %arg0, %c0_i32, %arg1 : i32, i32, i32
  }
}

module attributes {stable_mosaic.version = 11 : i64} {
  func.func @_ln_mlp_kernel(%arg0: i32, %arg1: i32, %arg2: memref<16x32xbf16, #tpu.memory_space<vmem>>, %arg3: memref<1x32xf32, #tpu.memory_space<vmem>>, %arg4: memref<1x32xf32, #tpu.memory_space<vmem>>, %arg5: memref<32x128xbf16, #tpu.memory_space<vmem>>, %arg6: memref<128x32xbf16, #tpu.memory_space<vmem>>, %arg7: memref<16x32xbf16, #tpu.memory_space<vmem>>, %arg8: memref<16x32xf32, #tpu.memory_space<vmem>>, %arg9: memref<16x32xbf16, #tpu.memory_space<vmem>>) attributes {dimension_semantics = [#tpu.dimension_semantics<parallel>, #tpu.dimension_semantics<arbitrary>], iteration_bounds = array<i64: 1, 1>, scalar_prefetch = 0 : i64, scratch_operands = 2 : i64, tpu.core_type = #tpu.core_type<tc>, window_params = [{transform_indices = @transform_0, window_bounds = array<i64: 16, 32>}, {pipeline_mode = #tpu.pipeline_mode<synchronous>, transform_indices = @transform_1, window_bounds = array<i64: 1, 32>}, {pipeline_mode = #tpu.pipeline_mode<synchronous>, transform_indices = @transform_2, window_bounds = array<i64: 1, 32>}, {transform_indices = @transform_3, window_bounds = array<i64: 32, 128>}, {transform_indices = @transform_4, window_bounds = array<i64: 128, 32>}, {transform_indices = @transform_5, window_bounds = array<i64: 16, 32>}]} {
    %c0_i32 = arith.constant 0 : i32
    %0 = arith.cmpi eq, %arg1, %c0_i32 : i32
    %1 = arith.extui %0 : i1 to i32
    %c0_i32_0 = arith.constant 0 : i32
    %2 = arith.cmpi ne, %1, %c0_i32_0 : i32
    scf.if %2 {
      %cst_16 = arith.constant 0.000000e+00 : f32
      %23 = vector.broadcast %cst_16 : f32 to vector<16x32xf32>
      %c0_17 = arith.constant 0 : index
      %c0_18 = arith.constant 0 : index
      %24 = vector.load %arg8[%c0_17, %c0_18] : memref<16x32xf32, #tpu.memory_space<vmem>>, vector<16x32xf32>
      tpu.vector_store %arg8[%c0_17, %c0_18], %23 {strides = array<i32>} : memref<16x32xf32, #tpu.memory_space<vmem>>, vector<16x32xf32>,
      %c0_19 = arith.constant 0 : index
      %c0_20 = arith.constant 0 : index
      %25 = vector.load %arg2[%c0_19, %c0_20] : memref<16x32xbf16, #tpu.memory_space<vmem>>, vector<16x32xbf16>
      %c0_21 = arith.constant 0 : index
      %c0_22 = arith.constant 0 : index
      %26 = vector.load %arg3[%c0_21, %c0_22] : memref<1x32xf32, #tpu.memory_space<vmem>>, vector<1x32xf32>
      %c0_23 = arith.constant 0 : index
      %c0_24 = arith.constant 0 : index
      %27 = vector.load %arg4[%c0_23, %c0_24] : memref<1x32xf32, #tpu.memory_space<vmem>>, vector<1x32xf32>
      %28 = arith.extf %25 : vector<16x32xbf16> to vector<16x32xf32>
      %cst_25 = arith.constant dense<0.000000e+00> : vector<16xf32>
      %29 = vector.multi_reduction <add>, %28, %cst_25 [1] : vector<16x32xf32> to vector<16xf32>
      %30 = vector.shape_cast %29 : vector<16xf32> to vector<16x1xf32>
      %cst_26 = arith.constant 3.200000e+01 : f32
      %31 = vector.broadcast %cst_26 : f32 to vector<16x1xf32>
      %32 = arith.divf %30, %31 : vector<16x1xf32>
      %33 = vector.broadcast %32 : vector<16x1xf32> to vector<16x32xf32>
      %34 = arith.subf %28, %33 : vector<16x32xf32>
      %35 = arith.mulf %34, %34 : vector<16x32xf32>
      %cst_27 = arith.constant dense<0.000000e+00> : vector<16xf32>
      %36 = vector.multi_reduction <add>, %35, %cst_27 [1] : vector<16x32xf32> to vector<16xf32>
      %37 = vector.shape_cast %36 : vector<16xf32> to vector<16x1xf32>
      %cst_28 = arith.constant 3.200000e+01 : f32
      %38 = vector.broadcast %cst_28 : f32 to vector<16x1xf32>
      %39 = arith.divf %37, %38 : vector<16x1xf32>
      %cst_29 = arith.constant 9.99999974E-6 : f32
      %40 = vector.broadcast %cst_29 : f32 to vector<16x1xf32>
      %41 = arith.addf %39, %40 : vector<16x1xf32>
      %42 = math.rsqrt %41 : vector<16x1xf32>
      %43 = vector.broadcast %42 : vector<16x1xf32> to vector<16x32xf32>
      %44 = arith.mulf %34, %43 : vector<16x32xf32>
      %45 = vector.broadcast %26 : vector<1x32xf32> to vector<16x32xf32>
      %46 = arith.mulf %44, %45 : vector<16x32xf32>
      %47 = vector.broadcast %27 : vector<1x32xf32> to vector<16x32xf32>
      %48 = arith.addf %46, %47 : vector<16x32xf32>
      %49 = arith.truncf %48 : vector<16x32xf32> to vector<16x32xbf16>
      %c0_30 = arith.constant 0 : index
      %c0_31 = arith.constant 0 : index
      %50 = vector.load %arg9[%c0_30, %c0_31] : memref<16x32xbf16, #tpu.memory_space<vmem>>, vector<16x32xbf16>
      tpu.vector_store %arg9[%c0_30, %c0_31], %49 {strides = array<i32>} : memref<16x32xbf16, #tpu.memory_space<vmem>>, vector<16x32xbf16>,
    } else {
    }
    %c0 = arith.constant 0 : index
    %c0_1 = arith.constant 0 : index
    %3 = vector.load %arg9[%c0, %c0_1] : memref<16x32xbf16, #tpu.memory_space<vmem>>, vector<16x32xbf16>
    %c0_2 = arith.constant 0 : index
    %c0_3 = arith.constant 0 : index
    %4 = vector.load %arg5[%c0_2, %c0_3] : memref<32x128xbf16, #tpu.memory_space<vmem>>, vector<32x128xbf16>
    %cst = arith.constant dense<0.000000e+00> : vector<16x128xf32>
    %5 = tpu.matmul %3, %4, %cst {dimension_numbers = #tpu.dot_dimension_numbers<[1], [0], [0], [1], [0, 0, 1, 1], [], []>} : vector<16x32xbf16>, vector<32x128xbf16>, vector<16x128xf32> -> vector<16x128xf32>
    %cst_4 = arith.constant 5.000000e-01 : f32
    %6 = vector.broadcast %cst_4 : f32 to vector<16x128xf32>
    %7 = arith.mulf %6, %5 : vector<16x128xf32>
    %cst_5 = arith.constant 0.707106769 : f32
    %8 = vector.broadcast %cst_5 : f32 to vector<16x128xf32>
    %9 = arith.mulf %5, %8 : vector<16x128xf32>
    %10 = math.erf %9 : vector<16x128xf32>
    %cst_6 = arith.constant 1.000000e+00 : f32
    %11 = vector.broadcast %cst_6 : f32 to vector<16x128xf32>
    %12 = arith.addf %11, %10 : vector<16x128xf32>
    %13 = arith.mulf %7, %12 : vector<16x128xf32>
    %c0_7 = arith.constant 0 : index
    %c0_8 = arith.constant 0 : index
    %14 = vector.load %arg8[%c0_7, %c0_8] : memref<16x32xf32, #tpu.memory_space<vmem>>, vector<16x32xf32>
    %15 = arith.truncf %13 : vector<16x128xf32> to vector<16x128xbf16>
    %c0_9 = arith.constant 0 : index
    %c0_10 = arith.constant 0 : index
    %16 = vector.load %arg6[%c0_9, %c0_10] : memref<128x32xbf16, #tpu.memory_space<vmem>>, vector<128x32xbf16>
    %cst_11 = arith.constant dense<0.000000e+00> : vector<16x32xf32>
    %17 = tpu.matmul %15, %16, %cst_11 {dimension_numbers = #tpu.dot_dimension_numbers<[1], [0], [0], [1], [0, 0, 1, 1], [], []>} : vector<16x128xbf16>, vector<128x32xbf16>, vector<16x32xf32> -> vector<16x32xf32>
    %18 = arith.addf %14, %17 : vector<16x32xf32>
    %c0_12 = arith.constant 0 : index
    %c0_13 = arith.constant 0 : index
    %19 = vector.load %arg8[%c0_12, %c0_13] : memref<16x32xf32, #tpu.memory_space<vmem>>, vector<16x32xf32>
    tpu.vector_store %arg8[%c0_12, %c0_13], %18 {strides = array<i32>} : memref<16x32xf32, #tpu.memory_space<vmem>>, vector<16x32xf32>,
    %c0_i32_14 = arith.constant 0 : i32
    %20 = arith.cmpi eq, %arg1, %c0_i32_14 : i32
    %21 = arith.extui %20 : i1 to i32
    %c0_i32_15 = arith.constant 0 : i32
    %22 = arith.cmpi ne, %21, %c0_i32_15 : i32
    scf.if %22 {
      %c0_16 = arith.constant 0 : index
      %c0_17 = arith.constant 0 : index
      %23 = vector.load %arg2[%c0_16, %c0_17] : memref<16x32xbf16, #tpu.memory_space<vmem>>, vector<16x32xbf16>
      %24 = arith.extf %23 : vector<16x32xbf16> to vector<16x32xf32>
      %c0_18 = arith.constant 0 : index
      %c0_19 = arith.constant 0 : index
      %25 = vector.load %arg8[%c0_18, %c0_19] : memref<16x32xf32, #tpu.memory_space<vmem>>, vector<16x32xf32>
      %26 = arith.addf %24, %25 : vector<16x32xf32>
      %27 = arith.truncf %26 : vector<16x32xf32> to vector<16x32xbf16>
      %c0_20 = arith.constant 0 : index
      %c0_21 = arith.constant 0 : index
      %28 = vector.load %arg7[%c0_20, %c0_21] : memref<16x32xbf16, #tpu.memory_space<vmem>>, vector<16x32xbf16>
      tpu.vector_store %arg7[%c0_20, %c0_21], %27 {strides = array<i32>} : memref<16x32xbf16, #tpu.memory_space<vmem>>, vector<16x32xbf16>,
    } else {
    }
    return
  }
  func.func @transform_0(%arg0: i32, %arg1: i32) -> (i32, i32) {
    %c0_i32 = arith.constant 0 : i32
    %c0_i32_0 = arith.constant 0 : i32
    return %arg0, %c0_i32 : i32, i32
  }
  func.func @transform_1(%arg0: i32, %arg1: i32) -> (i32, i32) {
    %c0_i32 = arith.constant 0 : i32
    %c0_i32_0 = arith.constant 0 : i32
    %c0_i32_1 = arith.constant 0 : i32
    return %c0_i32, %c0_i32_0 : i32, i32
  }
  func.func @transform_2(%arg0: i32, %arg1: i32) -> (i32, i32) {
    %c0_i32 = arith.constant 0 : i32
    %c0_i32_0 = arith.constant 0 : i32
    %c0_i32_1 = arith.constant 0 : i32
    return %c0_i32, %c0_i32_0 : i32, i32
  }
  func.func @transform_3(%arg0: i32, %arg1: i32) -> (i32, i32) {
    %c0_i32 = arith.constant 0 : i32
    %c0_i32_0 = arith.constant 0 : i32
    return %c0_i32, %arg1 : i32, i32
  }
  func.func @transform_4(%arg0: i32, %arg1: i32) -> (i32, i32) {
    %c0_i32 = arith.constant 0 : i32
    %c0_i32_0 = arith.constant 0 : i32
    return %arg1, %c0_i32 : i32, i32
  }
  func.func @transform_5(%arg0: i32, %arg1: i32) -> (i32, i32) {
    %c0_i32 = arith.constant 0 : i32
    %c0_i32_0 = arith.constant 0 : i32
    return %arg0, %c0_i32 : i32, i32
  }
}

module attributes {stable_mosaic.version = 11 : i64} {
  func.func @_layernorm_kernel(%arg0: i32, %arg1: memref<16x32xbf16, #tpu.memory_space<vmem>>, %arg2: memref<1x32xf32, #tpu.memory_space<vmem>>, %arg3: memref<1x32xf32, #tpu.memory_space<vmem>>, %arg4: memref<16x32xf32, #tpu.memory_space<vmem>>) attributes {dimension_semantics = [#tpu.dimension_semantics<parallel>], iteration_bounds = array<i64: 1>, scalar_prefetch = 0 : i64, scratch_operands = 0 : i64, tpu.core_type = #tpu.core_type<tc>, window_params = [{transform_indices = @transform_0, window_bounds = array<i64: 16, 32>}, {pipeline_mode = #tpu.pipeline_mode<synchronous>, transform_indices = @transform_1, window_bounds = array<i64: 1, 32>}, {pipeline_mode = #tpu.pipeline_mode<synchronous>, transform_indices = @transform_2, window_bounds = array<i64: 1, 32>}, {transform_indices = @transform_3, window_bounds = array<i64: 16, 32>}]} {
    %c0 = arith.constant 0 : index
    %c0_0 = arith.constant 0 : index
    %0 = vector.load %arg1[%c0, %c0_0] : memref<16x32xbf16, #tpu.memory_space<vmem>>, vector<16x32xbf16>
    %c0_1 = arith.constant 0 : index
    %c0_2 = arith.constant 0 : index
    %1 = vector.load %arg2[%c0_1, %c0_2] : memref<1x32xf32, #tpu.memory_space<vmem>>, vector<1x32xf32>
    %c0_3 = arith.constant 0 : index
    %c0_4 = arith.constant 0 : index
    %2 = vector.load %arg3[%c0_3, %c0_4] : memref<1x32xf32, #tpu.memory_space<vmem>>, vector<1x32xf32>
    %3 = arith.extf %0 : vector<16x32xbf16> to vector<16x32xf32>
    %cst = arith.constant dense<0.000000e+00> : vector<16xf32>
    %4 = vector.multi_reduction <add>, %3, %cst [1] : vector<16x32xf32> to vector<16xf32>
    %5 = vector.shape_cast %4 : vector<16xf32> to vector<16x1xf32>
    %cst_5 = arith.constant 3.200000e+01 : f32
    %6 = vector.broadcast %cst_5 : f32 to vector<16x1xf32>
    %7 = arith.divf %5, %6 : vector<16x1xf32>
    %8 = vector.broadcast %7 : vector<16x1xf32> to vector<16x32xf32>
    %9 = arith.subf %3, %8 : vector<16x32xf32>
    %10 = arith.mulf %9, %9 : vector<16x32xf32>
    %cst_6 = arith.constant dense<0.000000e+00> : vector<16xf32>
    %11 = vector.multi_reduction <add>, %10, %cst_6 [1] : vector<16x32xf32> to vector<16xf32>
    %12 = vector.shape_cast %11 : vector<16xf32> to vector<16x1xf32>
    %cst_7 = arith.constant 3.200000e+01 : f32
    %13 = vector.broadcast %cst_7 : f32 to vector<16x1xf32>
    %14 = arith.divf %12, %13 : vector<16x1xf32>
    %cst_8 = arith.constant 9.99999974E-6 : f32
    %15 = vector.broadcast %cst_8 : f32 to vector<16x1xf32>
    %16 = arith.addf %14, %15 : vector<16x1xf32>
    %17 = math.rsqrt %16 : vector<16x1xf32>
    %18 = vector.broadcast %17 : vector<16x1xf32> to vector<16x32xf32>
    %19 = arith.mulf %9, %18 : vector<16x32xf32>
    %20 = vector.broadcast %1 : vector<1x32xf32> to vector<16x32xf32>
    %21 = arith.mulf %19, %20 : vector<16x32xf32>
    %22 = vector.broadcast %2 : vector<1x32xf32> to vector<16x32xf32>
    %23 = arith.addf %21, %22 : vector<16x32xf32>
    %c0_9 = arith.constant 0 : index
    %c0_10 = arith.constant 0 : index
    %24 = vector.load %arg4[%c0_9, %c0_10] : memref<16x32xf32, #tpu.memory_space<vmem>>, vector<16x32xf32>
    tpu.vector_store %arg4[%c0_9, %c0_10], %23 {strides = array<i32>} : memref<16x32xf32, #tpu.memory_space<vmem>>, vector<16x32xf32>,
    return
  }
  func.func @transform_0(%arg0: i32) -> (i32, i32) {
    %c0_i32 = arith.constant 0 : i32
    %c0_i32_0 = arith.constant 0 : i32
    return %arg0, %c0_i32 : i32, i32
  }
  func.func @transform_1(%arg0: i32) -> (i32, i32) {
    %c0_i32 = arith.constant 0 : i32
    %c0_i32_0 = arith.constant 0 : i32
    %c0_i32_1 = arith.constant 0 : i32
    return %c0_i32, %c0_i32_0 : i32, i32
  }
  func.func @transform_2(%arg0: i32) -> (i32, i32) {
    %c0_i32 = arith.constant 0 : i32
    %c0_i32_0 = arith.constant 0 : i32
    %c0_i32_1 = arith.constant 0 : i32
    return %c0_i32, %c0_i32_0 : i32, i32
  }
  func.func @transform_3(%arg0: i32) -> (i32, i32) {
    %c0_i32 = arith.constant 0 : i32
    %c0_i32_0 = arith.constant 0 : i32
    return %arg0, %c0_i32 : i32, i32
  }
}

</mosaic_0001>

<llo_original>
// kernel: text_encoder_forward.11
$region0: #{text_encoder_forward.11}
  #allocation0 [shape = 'u32[]', space=smem, size = 0x4, offset = 0x4, fixed_abs, tag = 'smem constant byte address 0x4 - core index']
  #allocation1 [shape = 'u32[144,128]{1,0:T(1,128)}', space=vmem, size = 0x12000, scoped, tag = 'internal scratch']
  %s0 = inlined_call_operand.vmem [shape: bf16[16,32], index: 0, kind: input, shape index: {}]
  %s1 = inlined_call_operand.vmem [shape: bf16[32,32], index: 1, kind: input, shape index: {}]
  %s2 = inlined_call_operand.vmem [shape: bf16[16,32], index: 2, kind: input, shape index: {}]
  %s3 = inlined_call_operand.vmem [shape: bf16[16,32], index: 3, kind: output, shape index: {}]
  %s4 = sld [smem:[#allocation0]]
  $region22: #{text_encoder_forward.11} parent=0
    _
  %s6 = ssub.s32 1, %s4
  %s7 = scalar_select 0, %s6, %s4
  // Predicated region
  $region2: #{text_encoder_forward.11} parent=0 // pred_check
    _
  $region3: #{text_encoder_forward.11} parent=0 // pred_check_branch
    %9 = sbr.rel (0) target = $region5
  $region4: #{text_encoder_forward.11} parent=0 // pred_region
    _
  $region5: #{text_encoder_forward.11} parent=0 // pred_fallthru
    _
  // Predicated region
  $region6: #{text_encoder_forward.11} parent=0 // pred_check
    _
  $region7: #{text_encoder_forward.11} parent=0 // pred_check_branch
    %11 = sbr.rel (0) target = $region9
  $region8: #{text_encoder_forward.11} parent=0 // pred_region
    _
  $region9: #{text_encoder_forward.11} parent=0 // pred_fallthru
    _
  // Predicated region
  $region10: #{text_encoder_forward.11} parent=0 // pred_check
    _
  $region11: #{text_encoder_forward.11} parent=0 // pred_check_branch
    %13 = sbr.rel (0) target = $region13
  $region12: #{text_encoder_forward.11} parent=0 // pred_region
    _
  $region13: #{text_encoder_forward.11} parent=0 // pred_fallthru
    _
  %v15 = vld [vmem:[%s0] sm:$0xf]
  %v16 = vld [vmem:[%s0 + $0x4] sm:$0xf]
  %v17 = vld [vmem:[%s1] sm:$0xf]
  %v18 = vld [vmem:[%s1 + $0x4] sm:$0xf]
  %v19 = vld [vmem:[%s1 + $0x8] sm:$0xf]
  %v20 = vld [vmem:[%s1 + $0xc] sm:$0xf]
  %v23 = vunpack.c.l.b16 %v15
  %v24 = vunpack.c.l.b16 %v16
  %v25 = vpack.c.b16 %v24, %v23
  %v30 = vunpack.c.l.b16 %v17
  %v31 = vunpack.c.l.b16 %v18
  %v32 = vunpack.c.l.b16 %v19
  %v33 = vunpack.c.l.b16 %v20
  %v34 = vpack.c.b16 %v31, %v30
  %v35 = vpack.c.b16 %v33, %v32
  %vm38 = vcmask 261120
  %v40 = vsel %vm38, %v25, 0
  %42 = vmatprep.subr.bf16.mxu0 0
  %43 = vmatpush1.bf16.msra.mxu0 %v34
  %44 = vmatprep.subr.bf16.mxu0 0
  %45 = vmatpush1.bf16.msra.mxu0 %v35
  %46 = vmatprep.subr.bf16.mxu0 0
  %47 = vmatpush1.bf16.msra.mxu0 0
  %48 = vmatprep.subr.bf16.mxu0 0
  %49 = vmatpush1.bf16.msra.mxu0 0
  %50 = vmatprep.subr.bf16.mxu0 0
  %51 = vmatpush1.bf16.msra.mxu0 0
  %52 = vmatprep.subr.bf16.mxu0 0
  %53 = vmatpush1.bf16.msra.mxu0 0
  %54 = vmatprep.subr.bf16.mxu0 0
  %55 = vmatpush1.bf16.msra.mxu0 0
  %56 = vmatprep.subr.bf16.mxu0 0
  %57 = vmatpush1.bf16.msra.mxu0 0
  %58 = vmatprep.subr.bf16.mxu0 0
  %59 = vmatpush1.bf16.msra.mxu0 0
  %60 = vmatprep.subr.bf16.mxu0 0
  %61 = vmatpush1.bf16.msra.mxu0 0
  %62 = vmatprep.subr.bf16.mxu0 0
  %63 = vmatpush1.bf16.msra.mxu0 0
  %64 = vmatprep.subr.bf16.mxu0 0
  %65 = vmatpush1.bf16.msra.mxu0 0
  %66 = vmatprep.subr.bf16.mxu0 0
  %67 = vmatpush1.bf16.msra.mxu0 0
  %68 = vmatprep.subr.bf16.mxu0 0
  %69 = vmatpush1.bf16.msra.mxu0 0
  %70 = vmatprep.subr.bf16.mxu0 0
  %71 = vmatpush1.bf16.msra.mxu0 0
  %72 = vmatprep.subr.bf16.mxu0 0
  %73 = vmatpush1.bf16.msra.mxu0 0
  %74 = vmatprep.mubr.bf16.mxu0 0
  %75 = vmatmul.mubr.bf16.gmra.mrb[0].mxu0 %v40
  %v76 = vpop.f32.mrb[0].mxu0
  %v77 = vadd.f32 0.0, %v76
  %v78 = vpop.f32.mrb[0].mxu0
  %v79 = vpop.f32.mrb[0].mxu0
  %v80 = vadd.f32 0.0, %v79
  %v81 = vpop.f32.mrb[0].mxu0
  %82 = vdwg.mxu0
  %v83 = vld [vmem:[%s2] sm:$0xf]
  %v84 = vld [vmem:[%s2 + $0x4] sm:$0xf]
  %v85 = vunpack.c.l.bf16 %v83
  %v86 = vunpack.c.l.bf16 %v84
  %v87 = vadd.f32 %v85, %v77
  %v88 = vadd.f32 %v86, %v80
  %v89 = vpack.c.bf16 %v88, %v87
  %v91 = vunpack.c.l.b16 %v89
  %v92 = vunpack.c.h.b16 %v89
  %v93 = vpack.c.b16 %v91, %v91
  %v94 = vpack.c.b16 %v92, %v92
  %vm97 = vcmask 257024
  %98 = vst.msk [vmem:[%s3] sm:$0xf] %vm97, %v93
  %99 = vst.msk [vmem:[%s3 + $0x4] sm:$0xf] %vm97, %v94
  // Predicated region
  $region14: #{text_encoder_forward.11} parent=0 // pred_check
    _
  $region15: #{text_encoder_forward.11} parent=0 // pred_check_branch
    %101 = sbr.rel (0) target = $region17
  $region16: #{text_encoder_forward.11} parent=0 // pred_region
    _
  $region17: #{text_encoder_forward.11} parent=0 // pred_fallthru
    _
  // Predicated region
  $region18: #{text_encoder_forward.11} parent=0 // pred_check
    _
  $region19: #{text_encoder_forward.11} parent=0 // pred_check_branch
    %103 = sbr.rel (0) target = $region21
  $region20: #{text_encoder_forward.11} parent=0 // pred_region
    _
  $region21: #{text_encoder_forward.11} parent=0 // pred_fallthru
    _

// kernel: text_encoder_forward.9
$region0: #{text_encoder_forward.9}
  #allocation0 [shape = 'u32[]', space=smem, size = 0x4, offset = 0x4, fixed_abs, tag = 'smem constant byte address 0x4 - core index']
  #allocation1 [shape = 'u32[144,128]{1,0:T(1,128)}', space=vmem, size = 0x12000, scoped, tag = 'internal scratch']
  #allocation2 [shape = 'bf16[16,32]{1,0:T(16,128)(2,1)}', space=vmem, size = 0x1000, scoped, tag = 'scratch operand']
  %s0 = inlined_call_operand.vmem [shape: bf16[16,32], index: 0, kind: input, shape index: {}]
  %s1 = inlined_call_operand.vmem [shape: f32[1,32], index: 1, kind: input, shape index: {}]
  %s2 = inlined_call_operand.vmem [shape: f32[1,32], index: 2, kind: input, shape index: {}]
  %s3 = inlined_call_operand.vmem [shape: bf16[32,32], index: 3, kind: input, shape index: {}]
  %s4 = inlined_call_operand.vmem [shape: bf16[32,32], index: 4, kind: input, shape index: {}]
  %s5 = inlined_call_operand.vmem [shape: bf16[32,32], index: 5, kind: input, shape index: {}]
  %s6 = inlined_call_operand.vmem [shape: bf16[16,32], index: 6, kind: output, shape index: {0}]
  %s7 = inlined_call_operand.vmem [shape: bf16[16,32], index: 7, kind: output, shape index: {1}]
  %s8 = inlined_call_operand.vmem [shape: bf16[16,32], index: 8, kind: output, shape index: {2}]
  %9 = xla_tuple %s6, %s7, %s8
  %s10 = sld [smem:[#allocation0]]
  $region54: #{text_encoder_forward.9} parent=0
    _
  %s12 = ssub.s32 1, %s10
  %s13 = scalar_select 0, %s12, %s10
  // Predicated region
  $region2: #{text_encoder_forward.9} parent=0 // pred_check
    _
  $region3: #{text_encoder_forward.9} parent=0 // pred_check_branch
    %15 = sbr.rel (0) target = $region5
  $region4: #{text_encoder_forward.9} parent=0 // pred_region
    _
  $region5: #{text_encoder_forward.9} parent=0 // pred_fallthru
    _
  // Predicated region
  $region6: #{text_encoder_forward.9} parent=0 // pred_check
    _
  $region7: #{text_encoder_forward.9} parent=0 // pred_check_branch
    %17 = sbr.rel (0) target = $region9
  $region8: #{text_encoder_forward.9} parent=0 // pred_region
    _
  $region9: #{text_encoder_forward.9} parent=0 // pred_fallthru
    _
  // Predicated region
  $region10: #{text_encoder_forward.9} parent=0 // pred_check
    _
  $region11: #{text_encoder_forward.9} parent=0 // pred_check_branch
    %19 = sbr.rel (0) target = $region13
  $region12: #{text_encoder_forward.9} parent=0 // pred_region
    _
  $region13: #{text_encoder_forward.9} parent=0 // pred_fallthru
    _
  // Predicated region
  $region14: #{text_encoder_forward.9} parent=0 // pred_check
    _
  $region15: #{text_encoder_forward.9} parent=0 // pred_check_branch
    %21 = sbr.rel (0) target = $region17
  $region16: #{text_encoder_forward.9} parent=0 // pred_region
    _
  $region17: #{text_encoder_forward.9} parent=0 // pred_fallthru
    _
  // Predicated region
  $region18: #{text_encoder_forward.9} parent=0 // pred_check
    _
  $region19: #{text_encoder_forward.9} parent=0 // pred_check_branch
    %23 = sbr.rel (0) target = $region21
  $region20: #{text_encoder_forward.9} parent=0 // pred_region
    _
  $region21: #{text_encoder_forward.9} parent=0 // pred_fallthru
    _
  // Predicated region
  $region22: #{text_encoder_forward.9} parent=0 // pred_check
    _
  $region23: #{text_encoder_forward.9} parent=0 // pred_check_branch
    %25 = sbr.rel (0) target = $region25
  $region24: #{text_encoder_forward.9} parent=0 // pred_region
    _
  $region25: #{text_encoder_forward.9} parent=0 // pred_fallthru
    _
  %p27 = scmp.eq.s32.totalorder 0, 0
  // Predicated region
  $region26: #{text_encoder_forward.9} parent=0 // pred_check
    %p28 = pneg %p27
  $region27: #{text_encoder_forward.9} parent=0 // pred_check_branch
    %30 = sbr.rel (%p28) target = $region29
  $region28: #{text_encoder_forward.9} parent=0 // pred_region
    %v31 = vld [vmem:[%s0] sm:$0xf]
    %v32 = vld [vmem:[%s0 + $0x4] sm:$0xf]
    %v33 = vld [vmem:[%s1] sm:$0x1]
    %v34 = vld [vmem:[%s2] sm:$0x1]
    %v35 = vunpack.c.l.bf16 %v31
    %v36 = vunpack.c.l.bf16 %v32
    %vm37 = vcmask 261120
    %v38 = vsel %vm37, %v35, 0.0
    %39 = vadd.xlane.f32.xlu0 %v38
    %v40 = vpop.xlane.xlu0 %39
    %v41 = vsel %vm37, %v36, 0.0
    %42 = vadd.xlane.f32.xlu0 %v41
    %v43 = vpop.xlane.xlu0 %42
    %v44 = vrcp.pop 32.0
    %v45 = vmul.f32 %v40, %v44
    %v46 = vmul.f32 %v43, %v44
    %v47 = vsub.f32 %v35, %v45
    %v48 = vsub.f32 %v36, %v46
    %v49 = vmul.f32 %v47, %v47
    %v50 = vmul.f32 %v48, %v48
    %v51 = vsel %vm37, %v49, 0.0
    %52 = vadd.xlane.f32.xlu0 %v51
    %v53 = vpop.xlane.xlu0 %52
    %v54 = vsel %vm37, %v50, 0.0
    %55 = vadd.xlane.f32.xlu0 %v54
    %v56 = vpop.xlane.xlu0 %55
    %v57 = vmul.f32 %v53, %v44
    %v58 = vmul.f32 %v56, %v44
    %v59 = vadd.f32 %v57, 1e-05
    %v60 = vadd.f32 %v58, 1e-05
    %v61 = vrsqrt.pop %v59
    %v62 = vrsqrt.pop %v60
    %v63 = vmul.f32 %v47, %v61
    %v64 = vmul.f32 %v48, %v62
    %v66 = vlaneseq
    %v67 = vshrl.u32 %v66, 7
    %v68 = vsub.s32 0, %v67
    %v69 = vrot.slane %v33, %v68
    %v71 = vmul.f32 %v63, %v69
    %v72 = vmul.f32 %v64, %v69
    %v74 = vlaneseq
    %v75 = vshrl.u32 %v74, 7
    %v76 = vsub.s32 0, %v75
    %v77 = vrot.slane %v34, %v76
    %v79 = vadd.f32 %v71, %v77
    %v80 = vadd.f32 %v72, %v77
    %v81 = vpack.c.bf16 %v80, %v79
    %82 = vst.msk [vmem:[#allocation2] sm:$0xff] %vm37, %v81
  $region29: #{text_encoder_forward.9} parent=0 // pred_fallthru
    _
  %v83 = vld [vmem:[#allocation2] sm:$0xff]
  %v84 = vld [vmem:[%s3] sm:$0xf]
  %v85 = vld [vmem:[%s3 + $0x4] sm:$0xf]
  %v86 = vld [vmem:[%s3 + $0x8] sm:$0xf]
  %v87 = vld [vmem:[%s3 + $0xc] sm:$0xf]
  %v92 = vunpack.c.l.b16 %v84
  %v93 = vunpack.c.l.b16 %v85
  %v94 = vunpack.c.l.b16 %v86
  %v95 = vunpack.c.l.b16 %v87
  %v96 = vpack.c.b16 %v93, %v92
  %v97 = vpack.c.b16 %v95, %v94
  %vm100 = vcmask 261120
  %v102 = vsel %vm100, %v83, 0
  %104 = vmatprep.subr.bf16.mxu0 0
  %105 = vmatpush1.bf16.msra.mxu0 %v96
  %106 = vmatprep.subr.bf16.mxu0 0
  %107 = vmatpush1.bf16.msra.mxu0 %v97
  %108 = vmatprep.subr.bf16.mxu0 0
  %109 = vmatpush1.bf16.msra.mxu0 0
  %110 = vmatprep.subr.bf16.mxu0 0
  %111 = vmatpush1.bf16.msra.mxu0 0
  %112 = vmatprep.subr.bf16.mxu0 0
  %113 = vmatpush1.bf16.msra.mxu0 0
  %114 = vmatprep.subr.bf16.mxu0 0
  %115 = vmatpush1.bf16.msra.mxu0 0
  %116 = vmatprep.subr.bf16.mxu0 0
  %117 = vmatpush1.bf16.msra.mxu0 0
  %118 = vmatprep.subr.bf16.mxu0 0
  %119 = vmatpush1.bf16.msra.mxu0 0
  %120 = vmatprep.subr.bf16.mxu0 0
  %121 = vmatpush1.bf16.msra.mxu0 0
  %122 = vmatprep.subr.bf16.mxu0 0
  %123 = vmatpush1.bf16.msra.mxu0 0
  %124 = vmatprep.subr.bf16.mxu0 0
  %125 = vmatpush1.bf16.msra.mxu0 0
  %126 = vmatprep.subr.bf16.mxu0 0
  %127 = vmatpush1.bf16.msra.mxu0 0
  %128 = vmatprep.subr.bf16.mxu0 0
  %129 = vmatpush1.bf16.msra.mxu0 0
  %130 = vmatprep.subr.bf16.mxu0 0
  %131 = vmatpush1.bf16.msra.mxu0 0
  %132 = vmatprep.subr.bf16.mxu0 0
  %133 = vmatpush1.bf16.msra.mxu0 0
  %134 = vmatprep.subr.bf16.mxu0 0
  %135 = vmatpush1.bf16.msra.mxu0 0
  %136 = vmatprep.mubr.bf16.mxu0 0
  %137 = vmatmul.mubr.bf16.gmra.mrb[0].mxu0 %v102
  %v138 = vpop.f32.mrb[0].mxu0
  %v139 = vadd.f32 0.0, %v138
  %v140 = vpop.f32.mrb[0].mxu0
  %v141 = vpop.f32.mrb[0].mxu0
  %v142 = vadd.f32 0.0, %v141
  %v143 = vpop.f32.mrb[0].mxu0
  %144 = vdwg.mxu0
  %v145 = vpack.c.bf16 %v142, %v139
  %v147 = vunpack.c.l.b16 %v145
  %v148 = vunpack.c.h.b16 %v145
  %v149 = vpack.c.b16 %v147, %v147
  %v150 = vpack.c.b16 %v148, %v148
  %vm153 = vcmask 257024
  %154 = vst.msk [vmem:[%s6] sm:$0xf] %vm153, %v149
  %155 = vst.msk [vmem:[%s6 + $0x4] sm:$0xf] %vm153, %v150
  %v156 = vld [vmem:[%s4] sm:$0xf]
  %v157 = vld [vmem:[%s4 + $0x4] sm:$0xf]
  %v158 = vld [vmem:[%s4 + $0x8] sm:$0xf]
  %v159 = vld [vmem:[%s4 + $0xc] sm:$0xf]
  %v164 = vunpack.c.l.b16 %v156
  %v165 = vunpack.c.l.b16 %v157
  %v166 = vunpack.c.l.b16 %v158
  %v167 = vunpack.c.l.b16 %v159
  %v168 = vpack.c.b16 %v165, %v164
  %v169 = vpack.c.b16 %v167, %v166
  %172 = vmatprep.subr.bf16.mxu0 0
  %173 = vmatpush1.bf16.msra.mxu0 %v168
  %174 = vmatprep.subr.bf16.mxu0 0
  %175 = vmatpush1.bf16.msra.mxu0 %v169
  %176 = vmatprep.subr.bf16.mxu0 0
  %177 = vmatpush1.bf16.msra.mxu0 0
  %178 = vmatprep.subr.bf16.mxu0 0
  %179 = vmatpush1.bf16.msra.mxu0 0
  %180 = vmatprep.subr.bf16.mxu0 0
  %181 = vmatpush1.bf16.msra.mxu0 0
  %182 = vmatprep.subr.bf16.mxu0 0
  %183 = vmatpush1.bf16.msra.mxu0 0
  %184 = vmatprep.subr.bf16.mxu0 0
  %185 = vmatpush1.bf16.msra.mxu0 0
  %186 = vmatprep.subr.bf16.mxu0 0
  %187 = vmatpush1.bf16.msra.mxu0 0
  %188 = vmatprep.subr.bf16.mxu0 0
  %189 = vmatpush1.bf16.msra.mxu0 0
  %190 = vmatprep.subr.bf16.mxu0 0
  %191 = vmatpush1.bf16.msra.mxu0 0
  %192 = vmatprep.subr.bf16.mxu0 0
  %193 = vmatpush1.bf16.msra.mxu0 0
  %194 = vmatprep.subr.bf16.mxu0 0
  %195 = vmatpush1.bf16.msra.mxu0 0
  %196 = vmatprep.subr.bf16.mxu0 0
  %197 = vmatpush1.bf16.msra.mxu0 0
  %198 = vmatprep.subr.bf16.mxu0 0
  %199 = vmatpush1.bf16.msra.mxu0 0
  %200 = vmatprep.subr.bf16.mxu0 0
  %201 = vmatpush1.bf16.msra.mxu0 0
  %202 = vmatprep.subr.bf16.mxu0 0
  %203 = vmatpush1.bf16.msra.mxu0 0
  %204 = vmatprep.mubr.bf16.mxu0 0
  %205 = vmatmul.mubr.bf16.gmra.mrb[0].mxu0 %v102
  %v206 = vpop.f32.mrb[0].mxu0
  %v207 = vadd.f32 0.0, %v206
  %v208 = vpop.f32.mrb[0].mxu0
  %v209 = vpop.f32.mrb[0].mxu0
  %v210 = vadd.f32 0.0, %v209
  %v211 = vpop.f32.mrb[0].mxu0
  %212 = vdwg.mxu0
  %v213 = vpack.c.bf16 %v210, %v207
  %v215 = vunpack.c.l.b16 %v213
  %v216 = vunpack.c.h.b16 %v213
  %v217 = vpack.c.b16 %v215, %v215
  %v218 = vpack.c.b16 %v216, %v216
  %221 = vst.msk [vmem:[%s7] sm:$0xf] %vm153, %v217
  %222 = vst.msk [vmem:[%s7 + $0x4] sm:$0xf] %vm153, %v218
  %v223 = vld [vmem:[%s5] sm:$0xf]
  %v224 = vld [vmem:[%s5 + $0x4] sm:$0xf]
  %v225 = vld [vmem:[%s5 + $0x8] sm:$0xf]
  %v226 = vld [vmem:[%s5 + $0xc] sm:$0xf]
  %v231 = vunpack.c.l.b16 %v223
  %v232 = vunpack.c.l.b16 %v224
  %v233 = vunpack.c.l.b16 %v225
  %v234 = vunpack.c.l.b16 %v226
  %v235 = vpack.c.b16 %v232, %v231
  %v236 = vpack.c.b16 %v234, %v233
  %239 = vmatprep.subr.bf16.mxu0 0
  %240 = vmatpush1.bf16.msra.mxu0 %v235
  %241 = vmatprep.subr.bf16.mxu0 0
  %242 = vmatpush1.bf16.msra.mxu0 %v236
  %243 = vmatprep.subr.bf16.mxu0 0
  %244 = vmatpush1.bf16.msra.mxu0 0
  %245 = vmatprep.subr.bf16.mxu0 0
  %246 = vmatpush1.bf16.msra.mxu0 0
  %247 = vmatprep.subr.bf16.mxu0 0
  %248 = vmatpush1.bf16.msra.mxu0 0
  %249 = vmatprep.subr.bf16.mxu0 0
  %250 = vmatpush1.bf16.msra.mxu0 0
  %251 = vmatprep.subr.bf16.mxu0 0
  %252 = vmatpush1.bf16.msra.mxu0 0
  %253 = vmatprep.subr.bf16.mxu0 0
  %254 = vmatpush1.bf16.msra.mxu0 0
  %255 = vmatprep.subr.bf16.mxu0 0
  %256 = vmatpush1.bf16.msra.mxu0 0
  %257 = vmatprep.subr.bf16.mxu0 0
  %258 = vmatpush1.bf16.msra.mxu0 0
  %259 = vmatprep.subr.bf16.mxu0 0
  %260 = vmatpush1.bf16.msra.mxu0 0
  %261 = vmatprep.subr.bf16.mxu0 0
  %262 = vmatpush1.bf16.msra.mxu0 0
  %263 = vmatprep.subr.bf16.mxu0 0
  %264 = vmatpush1.bf16.msra.mxu0 0
  %265 = vmatprep.subr.bf16.mxu0 0
  %266 = vmatpush1.bf16.msra.mxu0 0
  %267 = vmatprep.subr.bf16.mxu0 0
  %268 = vmatpush1.bf16.msra.mxu0 0
  %269 = vmatprep.subr.bf16.mxu0 0
  %270 = vmatpush1.bf16.msra.mxu0 0
  %271 = vmatprep.mubr.bf16.mxu0 0
  %272 = vmatmul.mubr.bf16.gmra.mrb[0].mxu0 %v102
  %v273 = vpop.f32.mrb[0].mxu0
  %v274 = vadd.f32 0.0, %v273
  %v275 = vpop.f32.mrb[0].mxu0
  %v276 = vpop.f32.mrb[0].mxu0
  %v277 = vadd.f32 0.0, %v276
  %v278 = vpop.f32.mrb[0].mxu0
  %279 = vdwg.mxu0
  %v280 = vpack.c.bf16 %v277, %v274
  %v282 = vunpack.c.l.b16 %v280
  %v283 = vunpack.c.h.b16 %v280
  %v284 = vpack.c.b16 %v282, %v282
  %v285 = vpack.c.b16 %v283, %v283
  %288 = vst.msk [vmem:[%s8] sm:$0xf] %vm153, %v284
  %289 = vst.msk [vmem:[%s8 + $0x4] sm:$0xf] %vm153, %v285
  // Predicated region
  $region30: #{text_encoder_forward.9} parent=0 // pred_check
    _
  $region31: #{text_encoder_forward.9} parent=0 // pred_check_branch
    %291 = sbr.rel (0) target = $region33
  $region32: #{text_encoder_forward.9} parent=0 // pred_region
    _
  $region33: #{text_encoder_forward.9} parent=0 // pred_fallthru
    _
  // Predicated region
  $region34: #{text_encoder_forward.9} parent=0 // pred_check
    _
  $region35: #{text_encoder_forward.9} parent=0 // pred_check_branch
    %293 = sbr.rel (0) target = $region37
  $region36: #{text_encoder_forward.9} parent=0 // pred_region
    _
  $region37: #{text_encoder_forward.9} parent=0 // pred_fallthru
    _
  // Predicated region
  $region38: #{text_encoder_forward.9} parent=0 // pred_check
    _
  $region39: #{text_encoder_forward.9} parent=0 // pred_check_branch
    %295 = sbr.rel (0) target = $region41
  $region40: #{text_encoder_forward.9} parent=0 // pred_region
    _
  $region41: #{text_encoder_forward.9} parent=0 // pred_fallthru
    _
  // Predicated region
  $region42: #{text_encoder_forward.9} parent=0 // pred_check
    _
  $region43: #{text_encoder_forward.9} parent=0 // pred_check_branch
    %297 = sbr.rel (0) target = $region45
  $region44: #{text_encoder_forward.9} parent=0 // pred_region
    _
  $region45: #{text_encoder_forward.9} parent=0 // pred_fallthru
    _
  // Predicated region
  $region46: #{text_encoder_forward.9} parent=0 // pred_check
    _
  $region47: #{text_encoder_forward.9} parent=0 // pred_check_branch
    %299 = sbr.rel (0) target = $region49
  $region48: #{text_encoder_forward.9} parent=0 // pred_region
    _
  $region49: #{text_encoder_forward.9} parent=0 // pred_fallthru
    _
  // Predicated region
  $region50: #{text_encoder_forward.9} parent=0 // pred_check
    _
  $region51: #{text_encoder_forward.9} parent=0 // pred_check_branch
    %301 = sbr.rel (0) target = $region53
  $region52: #{text_encoder_forward.9} parent=0 // pred_region
    _
  $region53: #{text_encoder_forward.9} parent=0 // pred_fallthru
    _

// kernel: text_encoder_forward.10
$region0: #{text_encoder_forward.10}
  #allocation0 [shape = 'u32[]', space=smem, size = 0x4, offset = 0x4, fixed_abs, tag = 'smem constant byte address 0x4 - core index']
  #allocation1 [shape = 'u32[144,128]{1,0:T(1,128)}', space=vmem, size = 0x12000, scoped, tag = 'internal scratch']
  %s0 = inlined_call_operand.vmem [shape: bf16[2,8,32], index: 0, kind: input, shape index: {}]
  %s1 = inlined_call_operand.vmem [shape: bf16[2,8,32], index: 1, kind: input, shape index: {}]
  %s2 = inlined_call_operand.vmem [shape: bf16[2,8,32], index: 2, kind: input, shape index: {}]
  %s3 = inlined_call_operand.vmem [shape: bf16[2,8,32], index: 3, kind: output, shape index: {}]
  %s4 = sld [smem:[#allocation0]]
  $region45: #{text_encoder_forward.10} parent=0
    _
  %s6 = ssub.s32 1, %s4
  %s7 = scalar_select 0, %s6, %s4
  loop: start=0, step=1, limit=4
  $region2: #{text_encoder_forward.10} parent=0 // loop_pre_header
    _
  $region3: #{text_encoder_forward.10} parent=0 // loop_header
    %s9 = sphi 0, %s13
    %p10 = scmp.ge.s32.totalorder %s9, 4
    %s16 = sphi 0, %s28
    %s17 = sphi 0, %s24
    %s18 = sphi 0, %s16
    %s19 = sphi 0, %s17
    %s20 = sphi 0, %s18
    %s21 = sphi 0, %s19
    %s33 = sphi 0, %s35
    %s36 = sphi 0, %s33
    %s37 = sphi 0, %s36
    %s53 = sphi 0, %s37
    %s61 = sphi 0, %s63
    %s64 = sphi 0, %s61
    %s65 = sphi 0, %s64
    %s81 = sphi 0, %s65
    %s89 = sphi 0, %s91
    %s92 = sphi 0, %s89
    %s93 = sphi 0, %s92
    %s109 = sphi 0, %s93
    %s117 = sphi 0, %s119
    %s120 = sphi 0, %s117
    %s121 = sphi 0, %s120
    %s137 = sphi 0, %s121
  $region4: #{text_encoder_forward.10} parent=0 // loop_header_branch
    %12 = sbr.rel (%p10) target = $region8
  $region5: #{text_encoder_forward.10} parent=0 // loop_body
    %s14 = ssub.s32 %s9, 1
    %s15 = ssub.s32 %s9, 2
    %s22 = sadd.s32 1, %s17
    %p23 = scmp.ge.s32.totalorder %s22, 1
    %s24 = scalar_select %p23, 0, %s22
    %s25 = sadd.s32 1, %s16
    %s26 = scalar_select %p23, %s25, %s16
    %p27 = scmp.ge.s32.totalorder %s26, 2
    %s28 = scalar_select %p27, 0, %s26
    %s29 = ssub.s32 %s16, %s28
    %s30 = ssub.s32 %s17, %s24
    %s31 = sor.u32 %s29, %s30
    %p32 = scmp.eq.s32.totalorder %s31, 0
    %s34 = sadd.s32 %s33, 1
    %s35 = scalar_select %p32, %s33, %s34
    %p38 = pneg %p32
    %p39 = scmp.eq.s32.totalorder %s9, 1
    %p40 = por %p38, %p39
    %p41 = scmp.ne.s32.totalorder %s33, %s36
    %p42 = scmp.eq.s32.totalorder %s9, 0
    %p43 = por %p41, %p42
    %p44 = scmp.ne.s32.totalorder %s33, %s36
    %p45 = scmp.eq.s32.totalorder %s14, 1
    %p46 = por %p44, %p45
    %p47 = scmp.ne.s32.totalorder %s36, %s37
    %p48 = scmp.eq.s32.totalorder %s14, 0
    %p49 = por %p47, %p48
    %p50 = scmp.ne.s32.totalorder %s36, %s37
    %p51 = scmp.eq.s32.totalorder %s15, 1
    %p52 = por %p50, %p51
    %p54 = scmp.ne.s32.totalorder %s37, %s53
    %p55 = scmp.eq.s32.totalorder %s15, 0
    %p56 = por %p54, %p55
    %s57 = ssub.s32 %s16, %s28
    %s58 = ssub.s32 %s17, %s24
    %s59 = sor.u32 %s57, %s58
    %p60 = scmp.eq.s32.totalorder %s59, 0
    %s62 = sadd.s32 %s61, 1
    %s63 = scalar_select %p60, %s61, %s62
    %p66 = pneg %p60
    %p67 = scmp.eq.s32.totalorder %s9, 1
    %p68 = por %p66, %p67
    %p69 = scmp.ne.s32.totalorder %s61, %s64
    %p70 = scmp.eq.s32.totalorder %s9, 0
    %p71 = por %p69, %p70
    %p72 = scmp.ne.s32.totalorder %s61, %s64
    %p73 = scmp.eq.s32.totalorder %s14, 1
    %p74 = por %p72, %p73
    %p75 = scmp.ne.s32.totalorder %s64, %s65
    %p76 = scmp.eq.s32.totalorder %s14, 0
    %p77 = por %p75, %p76
    %p78 = scmp.ne.s32.totalorder %s64, %s65
    %p79 = scmp.eq.s32.totalorder %s15, 1
    %p80 = por %p78, %p79
    %p82 = scmp.ne.s32.totalorder %s65, %s81
    %p83 = scmp.eq.s32.totalorder %s15, 0
    %p84 = por %p82, %p83
    %s85 = ssub.s32 %s16, %s28
    %s86 = ssub.s32 %s17, %s24
    %s87 = sor.u32 %s85, %s86
    %p88 = scmp.eq.s32.totalorder %s87, 0
    %s90 = sadd.s32 %s89, 1
    %s91 = scalar_select %p88, %s89, %s90
    %p94 = pneg %p88
    %p95 = scmp.eq.s32.totalorder %s9, 1
    %p96 = por %p94, %p95
    %p97 = scmp.ne.s32.totalorder %s89, %s92
    %p98 = scmp.eq.s32.totalorder %s9, 0
    %p99 = por %p97, %p98
    %p100 = scmp.ne.s32.totalorder %s89, %s92
    %p101 = scmp.eq.s32.totalorder %s14, 1
    %p102 = por %p100, %p101
    %p103 = scmp.ne.s32.totalorder %s92, %s93
    %p104 = scmp.eq.s32.totalorder %s14, 0
    %p105 = por %p103, %p104
    %p106 = scmp.ne.s32.totalorder %s92, %s93
    %p107 = scmp.eq.s32.totalorder %s15, 1
    %p108 = por %p106, %p107
    %p110 = scmp.ne.s32.totalorder %s93, %s109
    %p111 = scmp.eq.s32.totalorder %s15, 0
    %p112 = por %p110, %p111
    %s113 = ssub.s32 %s16, %s28
    %s114 = ssub.s32 %s17, %s24
    %s115 = sor.u32 %s113, %s114
    %p116 = scmp.eq.s32.totalorder %s115, 0
    %s118 = sadd.s32 %s117, 1
    %s119 = scalar_select %p116, %s117, %s118
    %p122 = pneg %p116
    %p123 = scmp.eq.s32.totalorder %s9, 1
    %p124 = por %p122, %p123
    %p125 = scmp.ne.s32.totalorder %s117, %s120
    %p126 = scmp.eq.s32.totalorder %s9, 0
    %p127 = por %p125, %p126
    %p128 = scmp.ne.s32.totalorder %s117, %s120
    %p129 = scmp.eq.s32.totalorder %s14, 1
    %p130 = por %p128, %p129
    %p131 = scmp.ne.s32.totalorder %s120, %s121
    %p132 = scmp.eq.s32.totalorder %s14, 0
    %p133 = por %p131, %p132
    %p134 = scmp.ne.s32.totalorder %s120, %s121
    %p135 = scmp.eq.s32.totalorder %s15, 1
    %p136 = por %p134, %p135
    %p138 = scmp.ne.s32.totalorder %s121, %s137
    %p139 = scmp.eq.s32.totalorder %s15, 0
    %p140 = por %p138, %p139
    %p141 = scmp.le.s32.totalorder 1, %s9
    %p142 = scmp.lt.s32.totalorder %s9, 3
    %p143 = pnand %p141, %p142
    %p144 = pneg %p143
    // Predicated region
    $region9: #{text_encoder_forward.10} parent=5 // pred_check
      _
    $region10: #{text_encoder_forward.10} parent=5 // pred_check_branch
      %146 = sbr.rel (%p143) target = $region12
    $region11: #{text_encoder_forward.10} parent=5 // pred_region
      %s147 = ssub.s32 %s9, 1
    $region12: #{text_encoder_forward.10} parent=5 // pred_fallthru
      _
    %p148 = scmp.lt.s32.totalorder %s9, 2
    // Predicated region
    $region13: #{text_encoder_forward.10} parent=5 // pred_check
      %p149 = pneg %p148
    $region14: #{text_encoder_forward.10} parent=5 // pred_check_branch
      %151 = sbr.rel (%p149) target = $region16
    $region15: #{text_encoder_forward.10} parent=5 // pred_region
      // Predicated region
      $region17: #{text_encoder_forward.10} parent=15 // pred_check
        %p152 = pneg %p43
      $region18: #{text_encoder_forward.10} parent=15 // pred_check_branch
        %154 = sbr.rel (%p152) target = $region20
      $region19: #{text_encoder_forward.10} parent=15 // pred_region
        %p155 = scmp.lt.s32.totalorder %s16, 1
        %s156 = scalar_select %p155, %s16, 1
        %p157 = scmp.lt.s32.totalorder %s17, 0
        %s158 = scalar_select %p157, %s17, 0
        %s159 = sadd.s32 %s158, %s156
        %s160 = smul.addr %s159, 4
        %s161 = scalar_lea.vmem %s0, %s160
      $region20: #{text_encoder_forward.10} parent=15 // pred_fallthru
        _
      // Predicated region
      $region21: #{text_encoder_forward.10} parent=15 // pred_check
        %p162 = pneg %p71
      $region22: #{text_encoder_forward.10} parent=15 // pred_check_branch
        %164 = sbr.rel (%p162) target = $region24
      $region23: #{text_encoder_forward.10} parent=15 // pred_region
        %p165 = scmp.lt.s32.totalorder %s16, 1
        %s166 = scalar_select %p165, %s16, 1
        %p167 = scmp.lt.s32.totalorder %s17, 0
        %s168 = scalar_select %p167, %s17, 0
        %s169 = sadd.s32 %s168, %s166
        %s170 = smul.addr %s169, 4
        %s171 = scalar_lea.vmem %s1, %s170
      $region24: #{text_encoder_forward.10} parent=15 // pred_fallthru
        _
      // Predicated region
      $region25: #{text_encoder_forward.10} parent=15 // pred_check
        %p172 = pneg %p99
      $region26: #{text_encoder_forward.10} parent=15 // pred_check_branch
        %174 = sbr.rel (%p172) target = $region28
      $region27: #{text_encoder_forward.10} parent=15 // pred_region
        %p175 = scmp.lt.s32.totalorder %s16, 1
        %s176 = scalar_select %p175, %s16, 1
        %p177 = scmp.lt.s32.totalorder %s17, 0
        %s178 = scalar_select %p177, %s17, 0
        %s179 = sadd.s32 %s178, %s176
        %s180 = smul.addr %s179, 4
        %s181 = scalar_lea.vmem %s2, %s180
      $region28: #{text_encoder_forward.10} parent=15 // pred_fallthru
        _
    $region16: #{text_encoder_forward.10} parent=5 // pred_fallthru
      _
    %p182 = scmp.le.s32.totalorder 1, %s9
    %p183 = scmp.lt.s32.totalorder %s9, 3
    %p184 = pnand %p182, %p183
    %p185 = pneg %p184
    // Predicated region
    $region29: #{text_encoder_forward.10} parent=5 // pred_check
      _
    $region30: #{text_encoder_forward.10} parent=5 // pred_check_branch
      %187 = sbr.rel (%p184) target = $region32
    $region31: #{text_encoder_forward.10} parent=5 // pred_region
      %s188 = ssub.s32 %s9, 1
      %p189 = scmp.lt.s32.totalorder %s18, 1
      %s190 = scalar_select %p189, %s18, 1
      %p191 = scmp.lt.s32.totalorder %s19, 0
      %s192 = scalar_select %p191, %s19, 0
      %s193 = sadd.s32 %s192, %s190
      %s194 = smul.addr %s193, 4
      %s195 = scalar_lea.vmem %s0, %s194
      %p196 = pneg %p49
      %p197 = pneg %p46
      %p198 = scmp.lt.s32.totalorder %s18, 1
      %s199 = scalar_select %p198, %s18, 1
      %p200 = scmp.lt.s32.totalorder %s19, 0
      %s201 = scalar_select %p200, %s19, 0
      %s202 = sadd.s32 %s201, %s199
      %s203 = smul.addr %s202, 4
      %s204 = scalar_lea.vmem %s1, %s203
      %p205 = pneg %p77
      %p206 = pneg %p74
      %p207 = scmp.lt.s32.totalorder %s18, 1
      %s208 = scalar_select %p207, %s18, 1
      %p209 = scmp.lt.s32.totalorder %s19, 0
      %s210 = scalar_select %p209, %s19, 0
      %s211 = sadd.s32 %s210, %s208
      %s212 = smul.addr %s211, 4
      %s213 = scalar_lea.vmem %s2, %s212
      %p214 = pneg %p105
      %p215 = pneg %p102
      %p216 = pneg %p133
      %p217 = pneg %p130
      %p218 = scmp.lt.s32.totalorder %s18, 1
      %s219 = scalar_select %p218, %s18, 1
      %p220 = scmp.lt.s32.totalorder %s19, 0
      %s221 = scalar_select %p220, %s19, 0
      %s222 = sadd.s32 %s221, %s219
      %s223 = smul.addr %s222, 4
      %s224 = scalar_lea.vmem %s3, %s223
      %p225 = scmp.lt.s32.totalorder %s18, 1
      %s226 = scalar_select %p225, %s18, 1
      %p227 = scmp.lt.s32.totalorder %s19, 0
      %s228 = scalar_select %p227, %s19, 0
      %s229 = sadd.s32 %s228, %s226
      %s230 = smul.addr %s229, 4
      %s231 = scalar_lea.vmem %s0, %s230
      %p232 = scmp.lt.s32.totalorder %s18, 1
      %s233 = scalar_select %p232, %s18, 1
      %p234 = scmp.lt.s32.totalorder %s19, 0
      %s235 = scalar_select %p234, %s19, 0
      %s236 = sadd.s32 %s235, %s233
      %s237 = smul.addr %s236, 4
      %s238 = scalar_lea.vmem %s1, %s237
      %p239 = scmp.lt.s32.totalorder %s18, 1
      %s240 = scalar_select %p239, %s18, 1
      %p241 = scmp.lt.s32.totalorder %s19, 0
      %s242 = scalar_select %p241, %s19, 0
      %s243 = sadd.s32 %s242, %s240
      %s244 = smul.addr %s243, 4
      %s245 = scalar_lea.vmem %s2, %s244
      %p246 = scmp.lt.s32.totalorder %s18, 1
      %s247 = scalar_select %p246, %s18, 1
      %p248 = scmp.lt.s32.totalorder %s19, 0
      %s249 = scalar_select %p248, %s19, 0
      %s250 = sadd.s32 %s249, %s247
      %s251 = smul.addr %s250, 4
      %s252 = scalar_lea.vmem %s3, %s251
      %v254 = vld [vmem:[%s231] sm:$0xf]
      %v255 = vunpack.c.l.bf16 %v254
      %v256 = vmul.f32 %v255, 0.35355338
      %v257 = vpack.c.bf16 %v256, %v256
      %v258 = vld [vmem:[%s238] sm:$0xf]
      %v259 = vld [vmem:[%s245] sm:$0xf]
      %vm260 = vcmask 64512
      %v262 = vsel %vm260, %v257, 0
      %v265 = vsel %vm260, %v258, 0
      %267 = vmatprep.subr.bf16.mxu0 0
      %268 = vmatpush1.bf16.xpose.msra.mxu0 %v265
      %269 = vmatprep.subr.bf16.mxu0 0
      %270 = vmatpush1.bf16.xpose.msra.mxu0 0
      %271 = vmatprep.subr.bf16.mxu0 0
      %272 = vmatpush1.bf16.xpose.msra.mxu0 0
      %273 = vmatprep.subr.bf16.mxu0 0
      %274 = vmatpush1.bf16.xpose.msra.mxu0 0
      %275 = vmatprep.subr.bf16.mxu0 0
      %276 = vmatpush1.bf16.xpose.msra.mxu0 0
      %277 = vmatprep.subr.bf16.mxu0 0
      %278 = vmatpush1.bf16.xpose.msra.mxu0 0
      %279 = vmatprep.subr.bf16.mxu0 0
      %280 = vmatpush1.bf16.xpose.msra.mxu0 0
      %281 = vmatprep.subr.bf16.mxu0 0
      %282 = vmatpush1.bf16.xpose.msra.mxu0 0
      %283 = vmatprep.subr.bf16.mxu0 0
      %284 = vmatpush1.bf16.xpose.msra.mxu0 0
      %285 = vmatprep.subr.bf16.mxu0 0
      %286 = vmatpush1.bf16.xpose.msra.mxu0 0
      %287 = vmatprep.subr.bf16.mxu0 0
      %288 = vmatpush1.bf16.xpose.msra.mxu0 0
      %289 = vmatprep.subr.bf16.mxu0 0
      %290 = vmatpush1.bf16.xpose.msra.mxu0 0
      %291 = vmatprep.subr.bf16.mxu0 0
      %292 = vmatpush1.bf16.xpose.msra.mxu0 0
      %293 = vmatprep.subr.bf16.mxu0 0
      %294 = vmatpush1.bf16.xpose.msra.mxu0 0
      %295 = vmatprep.subr.bf16.mxu0 0
      %296 = vmatpush1.bf16.xpose.msra.mxu0 0
      %297 = vmatprep.subr.bf16.mxu0 0
      %298 = vmatpush1.bf16.xpose.msra.mxu0 0
      %299 = vmatprep.mubr.bf16.mxu0 0
      %300 = vmatmul.mubr.bf16.gmra.mrb[0].mxu0 %v262
      %v301 = vpop.f32.mrb[0].mxu0
      %v302 = vadd.f32 0.0, %v301
      %v303 = vpop.f32.mrb[0].mxu0
      %v304 = vpop.f32.mrb[0].mxu0
      %v305 = vpop.f32.mrb[0].mxu0
      %306 = vdwg.mxu0
      %v307 = vsel %vm260, %v302, -inf
      %308 = vmax.xlane.f32.xlu0 %v307
      %v309 = vpop.xlane.xlu0 %308
      %v310 = vsub.f32 %v302, %v309
      %v311 = vmul.f32 %v310, 1.442695
      %v312 = vpow.pop %v311
      %v313 = vsel %vm260, %v312, 0.0
      %314 = vadd.xlane.f32.xlu0 %v313
      %v315 = vpop.xlane.xlu0 %314
      %v316 = vpack.c.bf16 %v312, %v312
      %v318 = vsel %vm260, %v316, 0
      %vm320 = vcmask 1043456
      %v322 = vsel %vm320, %v259, 0
      %324 = vmatprep.subr.bf16.mxu0 0
      %325 = vmatpush1.bf16.msra.mxu0 %v322
      %326 = vmatprep.subr.bf16.mxu0 0
      %327 = vmatpush1.bf16.msra.mxu0 0
      %328 = vmatprep.subr.bf16.mxu0 0
      %329 = vmatpush1.bf16.msra.mxu0 0
      %330 = vmatprep.subr.bf16.mxu0 0
      %331 = vmatpush1.bf16.msra.mxu0 0
      %332 = vmatprep.subr.bf16.mxu0 0
      %333 = vmatpush1.bf16.msra.mxu0 0
      %334 = vmatprep.subr.bf16.mxu0 0
      %335 = vmatpush1.bf16.msra.mxu0 0
      %336 = vmatprep.subr.bf16.mxu0 0
      %337 = vmatpush1.bf16.msra.mxu0 0
      %338 = vmatprep.subr.bf16.mxu0 0
      %339 = vmatpush1.bf16.msra.mxu0 0
      %340 = vmatprep.subr.bf16.mxu0 0
      %341 = vmatpush1.bf16.msra.mxu0 0
      %342 = vmatprep.subr.bf16.mxu0 0
      %343 = vmatpush1.bf16.msra.mxu0 0
      %344 = vmatprep.subr.bf16.mxu0 0
      %345 = vmatpush1.bf16.msra.mxu0 0
      %346 = vmatprep.subr.bf16.mxu0 0
      %347 = vmatpush1.bf16.msra.mxu0 0
      %348 = vmatprep.subr.bf16.mxu0 0
      %349 = vmatpush1.bf16.msra.mxu0 0
      %350 = vmatprep.subr.bf16.mxu0 0
      %351 = vmatpush1.bf16.msra.mxu0 0
      %352 = vmatprep.subr.bf16.mxu0 0
      %353 = vmatpush1.bf16.msra.mxu0 0
      %354 = vmatprep.subr.bf16.mxu0 0
      %355 = vmatpush1.bf16.msra.mxu0 0
      %356 = vmatprep.mubr.bf16.mxu0 0
      %357 = vmatmul.mubr.bf16.gmra.mrb[0].mxu0 %v318
      %v358 = vpop.f32.mrb[0].mxu0
      %v359 = vadd.f32 0.0, %v358
      %v360 = vpop.f32.mrb[0].mxu0
      %v361 = vpop.f32.mrb[0].mxu0
      %v362 = vpop.f32.mrb[0].mxu0
      %363 = vdwg.mxu0
      %v364 = vrcp.pop %v315
      %v365 = vmul.f32 %v359, %v364
      %v366 = vpack.c.bf16 %v365, %v365
      %368 = vrot.lane.b32.xlu0 %v257, 120
      %v369 = vpop.permute.xlu0 %368
      %v371 = vunpack.c.l.b16 %v258
      %v372 = vpack.c.b16 %v371, %v371
      %373 = vrot.lane.b32.xlu0 %v372, 120
      %v374 = vpop.permute.xlu0 %373
      %v376 = vsel %vm260, %v369, 0
      %v379 = vsel %vm260, %v374, 0
      %381 = vmatprep.subr.bf16.mxu0 0
      %382 = vmatpush1.bf16.xpose.msra.mxu0 %v379
      %383 = vmatprep.subr.bf16.mxu0 0
      %384 = vmatpush1.bf16.xpose.msra.mxu0 0
      %385 = vmatprep.subr.bf16.mxu0 0
      %386 = vmatpush1.bf16.xpose.msra.mxu0 0
      %387 = vmatprep.subr.bf16.mxu0 0
      %388 = vmatpush1.bf16.xpose.msra.mxu0 0
      %389 = vmatprep.subr.bf16.mxu0 0
      %390 = vmatpush1.bf16.xpose.msra.mxu0 0
      %391 = vmatprep.subr.bf16.mxu0 0
      %392 = vmatpush1.bf16.xpose.msra.mxu0 0
      %393 = vmatprep.subr.bf16.mxu0 0
      %394 = vmatpush1.bf16.xpose.msra.mxu0 0
      %395 = vmatprep.subr.bf16.mxu0 0
      %396 = vmatpush1.bf16.xpose.msra.mxu0 0
      %397 = vmatprep.subr.bf16.mxu0 0
      %398 = vmatpush1.bf16.xpose.msra.mxu0 0
      %399 = vmatprep.subr.bf16.mxu0 0
      %400 = vmatpush1.bf16.xpose.msra.mxu0 0
      %401 = vmatprep.subr.bf16.mxu0 0
      %402 = vmatpush1.bf16.xpose.msra.mxu0 0
      %403 = vmatprep.subr.bf16.mxu0 0
      %404 = vmatpush1.bf16.xpose.msra.mxu0 0
      %405 = vmatprep.subr.bf16.mxu0 0
      %406 = vmatpush1.bf16.xpose.msra.mxu0 0
      %407 = vmatprep.subr.bf16.mxu0 0
      %408 = vmatpush1.bf16.xpose.msra.mxu0 0
      %409 = vmatprep.subr.bf16.mxu0 0
      %410 = vmatpush1.bf16.xpose.msra.mxu0 0
      %411 = vmatprep.subr.bf16.mxu0 0
      %412 = vmatpush1.bf16.xpose.msra.mxu0 0
      %413 = vmatprep.mubr.bf16.mxu0 0
      %414 = vmatmul.mubr.bf16.gmra.mrb[0].mxu0 %v376
      %v415 = vpop.f32.mrb[0].mxu0
      %v416 = vadd.f32 0.0, %v415
      %v417 = vpop.f32.mrb[0].mxu0
      %v418 = vpop.f32.mrb[0].mxu0
      %v419 = vpop.f32.mrb[0].mxu0
      %420 = vdwg.mxu0
      %v421 = vsel %vm260, %v416, -inf
      %422 = vmax.xlane.f32.xlu0 %v421
      %v423 = vpop.xlane.xlu0 %422
      %v424 = vsub.f32 %v416, %v423
      %v425 = vmul.f32 %v424, 1.442695
      %v426 = vpow.pop %v425
      %v427 = vsel %vm260, %v426, 0.0
      %428 = vadd.xlane.f32.xlu0 %v427
      %v429 = vpop.xlane.xlu0 %428
      %v430 = vpack.c.bf16 %v426, %v426
      %v432 = vunpack.c.l.b16 %v259
      %v433 = vpack.c.b16 %v432, %v432
      %434 = vrot.lane.b32.xlu0 %v433, 120
      %v435 = vpop.permute.xlu0 %434
      %v437 = vsel %vm260, %v430, 0
      %v440 = vsel %vm320, %v435, 0
      %442 = vmatprep.subr.bf16.mxu0 0
      %443 = vmatpush1.bf16.msra.mxu0 %v440
      %444 = vmatprep.subr.bf16.mxu0 0
      %445 = vmatpush1.bf16.msra.mxu0 0
      %446 = vmatprep.subr.bf16.mxu0 0
      %447 = vmatpush1.bf16.msra.mxu0 0
      %448 = vmatprep.subr.bf16.mxu0 0
      %449 = vmatpush1.bf16.msra.mxu0 0
      %450 = vmatprep.subr.bf16.mxu0 0
      %451 = vmatpush1.bf16.msra.mxu0 0
      %452 = vmatprep.subr.bf16.mxu0 0
      %453 = vmatpush1.bf16.msra.mxu0 0
      %454 = vmatprep.subr.bf16.mxu0 0
      %455 = vmatpush1.bf16.msra.mxu0 0
      %456 = vmatprep.subr.bf16.mxu0 0
      %457 = vmatpush1.bf16.msra.mxu0 0
      %458 = vmatprep.subr.bf16.mxu0 0
      %459 = vmatpush1.bf16.msra.mxu0 0
      %460 = vmatprep.subr.bf16.mxu0 0
      %461 = vmatpush1.bf16.msra.mxu0 0
      %462 = vmatprep.subr.bf16.mxu0 0
      %463 = vmatpush1.bf16.msra.mxu0 0
      %464 = vmatprep.subr.bf16.mxu0 0
      %465 = vmatpush1.bf16.msra.mxu0 0
      %466 = vmatprep.subr.bf16.mxu0 0
      %467 = vmatpush1.bf16.msra.mxu0 0
      %468 = vmatprep.subr.bf16.mxu0 0
      %469 = vmatpush1.bf16.msra.mxu0 0
      %470 = vmatprep.subr.bf16.mxu0 0
      %471 = vmatpush1.bf16.msra.mxu0 0
      %472 = vmatprep.subr.bf16.mxu0 0
      %473 = vmatpush1.bf16.msra.mxu0 0
      %474 = vmatprep.mubr.bf16.mxu0 0
      %475 = vmatmul.mubr.bf16.gmra.mrb[0].mxu0 %v437
      %v476 = vpop.f32.mrb[0].mxu0
      %v477 = vadd.f32 0.0, %v476
      %v478 = vpop.f32.mrb[0].mxu0
      %v479 = vpop.f32.mrb[0].mxu0
      %v480 = vpop.f32.mrb[0].mxu0
      %481 = vdwg.mxu0
      %v482 = vrcp.pop %v429
      %v483 = vmul.f32 %v477, %v482
      %v484 = vpack.c.bf16 %v483, %v483
      %485 = vrot.lane.b32.xlu0 %v257, 112
      %v486 = vpop.permute.xlu0 %485
      %487 = vrot.lane.b32.xlu0 %v372, 112
      %v488 = vpop.permute.xlu0 %487
      %v490 = vsel %vm260, %v486, 0
      %v493 = vsel %vm260, %v488, 0
      %495 = vmatprep.subr.bf16.mxu0 0
      %496 = vmatpush1.bf16.xpose.msra.mxu0 %v493
      %497 = vmatprep.subr.bf16.mxu0 0
      %498 = vmatpush1.bf16.xpose.msra.mxu0 0
      %499 = vmatprep.subr.bf16.mxu0 0
      %500 = vmatpush1.bf16.xpose.msra.mxu0 0
      %501 = vmatprep.subr.bf16.mxu0 0
      %502 = vmatpush1.bf16.xpose.msra.mxu0 0
      %503 = vmatprep.subr.bf16.mxu0 0
      %504 = vmatpush1.bf16.xpose.msra.mxu0 0
      %505 = vmatprep.subr.bf16.mxu0 0
      %506 = vmatpush1.bf16.xpose.msra.mxu0 0
      %507 = vmatprep.subr.bf16.mxu0 0
      %508 = vmatpush1.bf16.xpose.msra.mxu0 0
      %509 = vmatprep.subr.bf16.mxu0 0
      %510 = vmatpush1.bf16.xpose.msra.mxu0 0
      %511 = vmatprep.subr.bf16.mxu0 0
      %512 = vmatpush1.bf16.xpose.msra.mxu0 0
      %513 = vmatprep.subr.bf16.mxu0 0
      %514 = vmatpush1.bf16.xpose.msra.mxu0 0
      %515 = vmatprep.subr.bf16.mxu0 0
      %516 = vmatpush1.bf16.xpose.msra.mxu0 0
      %517 = vmatprep.subr.bf16.mxu0 0
      %518 = vmatpush1.bf16.xpose.msra.mxu0 0
      %519 = vmatprep.subr.bf16.mxu0 0
      %520 = vmatpush1.bf16.xpose.msra.mxu0 0
      %521 = vmatprep.subr.bf16.mxu0 0
      %522 = vmatpush1.bf16.xpose.msra.mxu0 0
      %523 = vmatprep.subr.bf16.mxu0 0
      %524 = vmatpush1.bf16.xpose.msra.mxu0 0
      %525 = vmatprep.subr.bf16.mxu0 0
      %526 = vmatpush1.bf16.xpose.msra.mxu0 0
      %527 = vmatprep.mubr.bf16.mxu0 0
      %528 = vmatmul.mubr.bf16.gmra.mrb[0].mxu0 %v490
      %v529 = vpop.f32.mrb[0].mxu0
      %v530 = vadd.f32 0.0, %v529
      %v531 = vpop.f32.mrb[0].mxu0
      %v532 = vpop.f32.mrb[0].mxu0
      %v533 = vpop.f32.mrb[0].mxu0
      %534 = vdwg.mxu0
      %v535 = vsel %vm260, %v530, -inf
      %536 = vmax.xlane.f32.xlu0 %v535
      %v537 = vpop.xlane.xlu0 %536
      %v538 = vsub.f32 %v530, %v537
      %v539 = vmul.f32 %v538, 1.442695
      %v540 = vpow.pop %v539
      %v541 = vsel %vm260, %v540, 0.0
      %542 = vadd.xlane.f32.xlu0 %v541
      %v543 = vpop.xlane.xlu0 %542
      %v544 = vpack.c.bf16 %v540, %v540
      %545 = vrot.lane.b32.xlu0 %v433, 112
      %v546 = vpop.permute.xlu0 %545
      %v548 = vsel %vm260, %v544, 0
      %v551 = vsel %vm320, %v546, 0
      %553 = vmatprep.subr.bf16.mxu0 0
      %554 = vmatpush1.bf16.msra.mxu0 %v551
      %555 = vmatprep.subr.bf16.mxu0 0
      %556 = vmatpush1.bf16.msra.mxu0 0
      %557 = vmatprep.subr.bf16.mxu0 0
      %558 = vmatpush1.bf16.msra.mxu0 0
      %559 = vmatprep.subr.bf16.mxu0 0
      %560 = vmatpush1.bf16.msra.mxu0 0
      %561 = vmatprep.subr.bf16.mxu0 0
      %562 = vmatpush1.bf16.msra.mxu0 0
      %563 = vmatprep.subr.bf16.mxu0 0
      %564 = vmatpush1.bf16.msra.mxu0 0
      %565 = vmatprep.subr.bf16.mxu0 0
      %566 = vmatpush1.bf16.msra.mxu0 0
      %567 = vmatprep.subr.bf16.mxu0 0
      %568 = vmatpush1.bf16.msra.mxu0 0
      %569 = vmatprep.subr.bf16.mxu0 0
      %570 = vmatpush1.bf16.msra.mxu0 0
      %571 = vmatprep.subr.bf16.mxu0 0
      %572 = vmatpush1.bf16.msra.mxu0 0
      %573 = vmatprep.subr.bf16.mxu0 0
      %574 = vmatpush1.bf16.msra.mxu0 0
      %575 = vmatprep.subr.bf16.mxu0 0
      %576 = vmatpush1.bf16.msra.mxu0 0
      %577 = vmatprep.subr.bf16.mxu0 0
      %578 = vmatpush1.bf16.msra.mxu0 0
      %579 = vmatprep.subr.bf16.mxu0 0
      %580 = vmatpush1.bf16.msra.mxu0 0
      %581 = vmatprep.subr.bf16.mxu0 0
      %582 = vmatpush1.bf16.msra.mxu0 0
      %583 = vmatprep.subr.bf16.mxu0 0
      %584 = vmatpush1.bf16.msra.mxu0 0
      %585 = vmatprep.mubr.bf16.mxu0 0
      %586 = vmatmul.mubr.bf16.gmra.mrb[0].mxu0 %v548
      %v587 = vpop.f32.mrb[0].mxu0
      %v588 = vadd.f32 0.0, %v587
      %v589 = vpop.f32.mrb[0].mxu0
      %v590 = vpop.f32.mrb[0].mxu0
      %v591 = vpop.f32.mrb[0].mxu0
      %592 = vdwg.mxu0
      %v593 = vrcp.pop %v543
      %v594 = vmul.f32 %v588, %v593
      %v595 = vpack.c.bf16 %v594, %v594
      %596 = vrot.lane.b32.xlu0 %v257, 104
      %v597 = vpop.permute.xlu0 %596
      %598 = vrot.lane.b32.xlu0 %v372, 104
      %v599 = vpop.permute.xlu0 %598
      %v601 = vsel %vm260, %v597, 0
      %v604 = vsel %vm260, %v599, 0
      %606 = vmatprep.subr.bf16.mxu0 0
      %607 = vmatpush1.bf16.xpose.msra.mxu0 %v604
      %608 = vmatprep.subr.bf16.mxu0 0
      %609 = vmatpush1.bf16.xpose.msra.mxu0 0
      %610 = vmatprep.subr.bf16.mxu0 0
      %611 = vmatpush1.bf16.xpose.msra.mxu0 0
      %612 = vmatprep.subr.bf16.mxu0 0
      %613 = vmatpush1.bf16.xpose.msra.mxu0 0
      %614 = vmatprep.subr.bf16.mxu0 0
      %615 = vmatpush1.bf16.xpose.msra.mxu0 0
      %616 = vmatprep.subr.bf16.mxu0 0
      %617 = vmatpush1.bf16.xpose.msra.mxu0 0
      %618 = vmatprep.subr.bf16.mxu0 0
      %619 = vmatpush1.bf16.xpose.msra.mxu0 0
      %620 = vmatprep.subr.bf16.mxu0 0
      %621 = vmatpush1.bf16.xpose.msra.mxu0 0
      %622 = vmatprep.subr.bf16.mxu0 0
      %623 = vmatpush1.bf16.xpose.msra.mxu0 0
      %624 = vmatprep.subr.bf16.mxu0 0
      %625 = vmatpush1.bf16.xpose.msra.mxu0 0
      %626 = vmatprep.subr.bf16.mxu0 0
      %627 = vmatpush1.bf16.xpose.msra.mxu0 0
      %628 = vmatprep.subr.bf16.mxu0 0
      %629 = vmatpush1.bf16.xpose.msra.mxu0 0
      %630 = vmatprep.subr.bf16.mxu0 0
      %631 = vmatpush1.bf16.xpose.msra.mxu0 0
      %632 = vmatprep.subr.bf16.mxu0 0
      %633 = vmatpush1.bf16.xpose.msra.mxu0 0
      %634 = vmatprep.subr.bf16.mxu0 0
      %635 = vmatpush1.bf16.xpose.msra.mxu0 0
      %636 = vmatprep.subr.bf16.mxu0 0
      %637 = vmatpush1.bf16.xpose.msra.mxu0 0
      %638 = vmatprep.mubr.bf16.mxu0 0
      %639 = vmatmul.mubr.bf16.gmra.mrb[0].mxu0 %v601
      %v640 = vpop.f32.mrb[0].mxu0
      %v641 = vadd.f32 0.0, %v640
      %v642 = vpop.f32.mrb[0].mxu0
      %v643 = vpop.f32.mrb[0].mxu0
      %v644 = vpop.f32.mrb[0].mxu0
      %645 = vdwg.mxu0
      %v646 = vsel %vm260, %v641, -inf
      %647 = vmax.xlane.f32.xlu0 %v646
      %v648 = vpop.xlane.xlu0 %647
      %v649 = vsub.f32 %v641, %v648
      %v650 = vmul.f32 %v649, 1.442695
      %v651 = vpow.pop %v650
      %v652 = vsel %vm260, %v651, 0.0
      %653 = vadd.xlane.f32.xlu0 %v652
      %v654 = vpop.xlane.xlu0 %653
      %v655 = vpack.c.bf16 %v651, %v651
      %656 = vrot.lane.b32.xlu0 %v433, 104
      %v657 = vpop.permute.xlu0 %656
      %v659 = vsel %vm260, %v655, 0
      %v662 = vsel %vm320, %v657, 0
      %664 = vmatprep.subr.bf16.mxu0 0
      %665 = vmatpush1.bf16.msra.mxu0 %v662
      %666 = vmatprep.subr.bf16.mxu0 0
      %667 = vmatpush1.bf16.msra.mxu0 0
      %668 = vmatprep.subr.bf16.mxu0 0
      %669 = vmatpush1.bf16.msra.mxu0 0
      %670 = vmatprep.subr.bf16.mxu0 0
      %671 = vmatpush1.bf16.msra.mxu0 0
      %672 = vmatprep.subr.bf16.mxu0 0
      %673 = vmatpush1.bf16.msra.mxu0 0
      %674 = vmatprep.subr.bf16.mxu0 0
      %675 = vmatpush1.bf16.msra.mxu0 0
      %676 = vmatprep.subr.bf16.mxu0 0
      %677 = vmatpush1.bf16.msra.mxu0 0
      %678 = vmatprep.subr.bf16.mxu0 0
      %679 = vmatpush1.bf16.msra.mxu0 0
      %680 = vmatprep.subr.bf16.mxu0 0
      %681 = vmatpush1.bf16.msra.mxu0 0
      %682 = vmatprep.subr.bf16.mxu0 0
      %683 = vmatpush1.bf16.msra.mxu0 0
      %684 = vmatprep.subr.bf16.mxu0 0
      %685 = vmatpush1.bf16.msra.mxu0 0
      %686 = vmatprep.subr.bf16.mxu0 0
      %687 = vmatpush1.bf16.msra.mxu0 0
      %688 = vmatprep.subr.bf16.mxu0 0
      %689 = vmatpush1.bf16.msra.mxu0 0
      %690 = vmatprep.subr.bf16.mxu0 0
      %691 = vmatpush1.bf16.msra.mxu0 0
      %692 = vmatprep.subr.bf16.mxu0 0
      %693 = vmatpush1.bf16.msra.mxu0 0
      %694 = vmatprep.subr.bf16.mxu0 0
      %695 = vmatpush1.bf16.msra.mxu0 0
      %696 = vmatprep.mubr.bf16.mxu0 0
      %697 = vmatmul.mubr.bf16.gmra.mrb[0].mxu0 %v659
      %v698 = vpop.f32.mrb[0].mxu0
      %v699 = vadd.f32 0.0, %v698
      %v700 = vpop.f32.mrb[0].mxu0
      %v701 = vpop.f32.mrb[0].mxu0
      %v702 = vpop.f32.mrb[0].mxu0
      %703 = vdwg.mxu0
      %v704 = vrcp.pop %v654
      %v705 = vmul.f32 %v699, %v704
      %v706 = vpack.c.bf16 %v705, %v705
      %708 = vrot.lane.b32.xlu0 %v484, 8
      %v709 = vpop.permute.xlu0 %708
      %711 = vrot.lane.b32.xlu0 %v595, 16
      %v712 = vpop.permute.xlu0 %711
      %714 = vrot.lane.b32.xlu0 %v706, 24
      %v715 = vpop.permute.xlu0 %714
      %v718 = vsel %vm260, %v366, %v709
      %vm719 = vcmask 130048
      %v721 = vsel %vm719, %v718, %v712
      %vm722 = vcmask 195584
      %v724 = vsel %vm722, %v721, %v715
      %vm726 = vcmask 257024
      %727 = vst.msk [vmem:[%s252] sm:$0xf] %vm726, %v724
      %p728 = scmp.lt.s32.totalorder %s18, 1
      %s729 = scalar_select %p728, %s18, 1
      %p730 = scmp.lt.s32.totalorder %s19, 0
      %s731 = scalar_select %p730, %s19, 0
      %s732 = sadd.s32 %s731, %s729
      %s733 = smul.addr %s732, 4
      %s734 = scalar_lea.vmem %s3, %s733
      // Predicated region
      $region33: #{text_encoder_forward.10} parent=31 // pred_check
        %p735 = pneg %p130
      $region34: #{text_encoder_forward.10} parent=31 // pred_check_branch
        %737 = sbr.rel (%p735) target = $region36
      $region35: #{text_encoder_forward.10} parent=31 // pred_region
        _
      $region36: #{text_encoder_forward.10} parent=31 // pred_fallthru
        _
    $region32: #{text_encoder_forward.10} parent=5 // pred_fallthru
      _
    %p738 = scmp.le.s32.totalorder 2, %s9
    // Predicated region
    $region37: #{text_encoder_forward.10} parent=5 // pred_check
      %p739 = pneg %p738
    $region38: #{text_encoder_forward.10} parent=5 // pred_check_branch
      %741 = sbr.rel (%p739) target = $region40
    $region39: #{text_encoder_forward.10} parent=5 // pred_region
      %s742 = ssub.s32 %s9, 2
      // Predicated region
      $region41: #{text_encoder_forward.10} parent=39 // pred_check
        %p743 = pneg %p136
      $region42: #{text_encoder_forward.10} parent=39 // pred_check_branch
        %745 = sbr.rel (%p743) target = $region44
      $region43: #{text_encoder_forward.10} parent=39 // pred_region
        %p746 = scmp.lt.s32.totalorder %s20, 1
        %s747 = scalar_select %p746, %s20, 1
        %p748 = scmp.lt.s32.totalorder %s21, 0
        %s749 = scalar_select %p748, %s21, 0
        %s750 = sadd.s32 %s749, %s747
        %s751 = smul.addr %s750, 4
        %s752 = scalar_lea.vmem %s3, %s751
      $region44: #{text_encoder_forward.10} parent=39 // pred_fallthru
        _
    $region40: #{text_encoder_forward.10} parent=5 // pred_fallthru
      _
  $region6: #{text_encoder_forward.10} parent=0 // loop_footer
    %s13 = sadd.s32 1, %s9
  $region7: #{text_encoder_forward.10} parent=0 // loop_footer_branch
    %8 = sbr.rel target = $region3
  $region8: #{text_encoder_forward.10} parent=0 // loop_exit
    _

// kernel: text_encoder_forward.12
$region0: #{text_encoder_forward.12}
  #allocation0 [shape = 'u32[]', space=smem, size = 0x4, offset = 0x4, fixed_abs, tag = 'smem constant byte address 0x4 - core index']
  #allocation1 [shape = 'u32[144,128]{1,0:T(1,128)}', space=vmem, size = 0x12000, scoped, tag = 'internal scratch']
  #allocation2 [shape = 'f32[16,32]{1,0:T(8,128)}', space=vmem, size = 0x2000, scoped, tag = 'scratch operand']
  #allocation3 [shape = 'bf16[16,32]{1,0:T(16,128)(2,1)}', space=vmem, size = 0x1000, scoped, tag = 'scratch operand']
  %s0 = inlined_call_operand.vmem [shape: bf16[16,32], index: 0, kind: input, shape index: {}]
  %s1 = inlined_call_operand.vmem [shape: f32[1,32], index: 1, kind: input, shape index: {}]
  %s2 = inlined_call_operand.vmem [shape: f32[1,32], index: 2, kind: input, shape index: {}]
  %s3 = inlined_call_operand.vmem [shape: bf16[32,128], index: 3, kind: input, shape index: {}]
  %s4 = inlined_call_operand.vmem [shape: bf16[128,32], index: 4, kind: input, shape index: {}]
  %s5 = inlined_call_operand.vmem [shape: bf16[16,32], index: 5, kind: output, shape index: {}]
  %s6 = sld [smem:[#allocation0]]
  $region38: #{text_encoder_forward.12} parent=0
    _
  %s8 = ssub.s32 1, %s6
  %s9 = scalar_select 0, %s8, %s6
  // Predicated region
  $region2: #{text_encoder_forward.12} parent=0 // pred_check
    _
  $region3: #{text_encoder_forward.12} parent=0 // pred_check_branch
    %11 = sbr.rel (0) target = $region5
  $region4: #{text_encoder_forward.12} parent=0 // pred_region
    _
  $region5: #{text_encoder_forward.12} parent=0 // pred_fallthru
    _
  // Predicated region
  $region6: #{text_encoder_forward.12} parent=0 // pred_check
    _
  $region7: #{text_encoder_forward.12} parent=0 // pred_check_branch
    %13 = sbr.rel (0) target = $region9
  $region8: #{text_encoder_forward.12} parent=0 // pred_region
    _
  $region9: #{text_encoder_forward.12} parent=0 // pred_fallthru
    _
  // Predicated region
  $region10: #{text_encoder_forward.12} parent=0 // pred_check
    _
  $region11: #{text_encoder_forward.12} parent=0 // pred_check_branch
    %15 = sbr.rel (0) target = $region13
  $region12: #{text_encoder_forward.12} parent=0 // pred_region
    _
  $region13: #{text_encoder_forward.12} parent=0 // pred_fallthru
    _
  // Predicated region
  $region14: #{text_encoder_forward.12} parent=0 // pred_check
    _
  $region15: #{text_encoder_forward.12} parent=0 // pred_check_branch
    %17 = sbr.rel (0) target = $region17
  $region16: #{text_encoder_forward.12} parent=0 // pred_region
    _
  $region17: #{text_encoder_forward.12} parent=0 // pred_fallthru
    _
  // Predicated region
  $region18: #{text_encoder_forward.12} parent=0 // pred_check
    _
  $region19: #{text_encoder_forward.12} parent=0 // pred_check_branch
    %19 = sbr.rel (0) target = $region21
  $region20: #{text_encoder_forward.12} parent=0 // pred_region
    _
  $region21: #{text_encoder_forward.12} parent=0 // pred_fallthru
    _
  %p21 = scmp.eq.s32.totalorder 0, 0
  // Predicated region
  $region22: #{text_encoder_forward.12} parent=0 // pred_check
    %p22 = pneg %p21
  $region23: #{text_encoder_forward.12} parent=0 // pred_check_branch
    %24 = sbr.rel (%p22) target = $region25
  $region24: #{text_encoder_forward.12} parent=0 // pred_region
    %vm25 = vcmask 261120
    %26 = vst.msk [vmem:[#allocation2] sm:$0xff] %vm25, 0.0
    %27 = vst.msk [vmem:[#allocation2 + $0x8] sm:$0xff] %vm25, 0.0
    %v28 = vld [vmem:[%s0] sm:$0xf]
    %v29 = vld [vmem:[%s0 + $0x4] sm:$0xf]
    %v30 = vld [vmem:[%s1] sm:$0x1]
    %v31 = vld [vmem:[%s2] sm:$0x1]
    %v32 = vunpack.c.l.bf16 %v28
    %v33 = vunpack.c.l.bf16 %v29
    %v34 = vsel %vm25, %v32, 0.0
    %35 = vadd.xlane.f32.xlu0 %v34
    %v36 = vpop.xlane.xlu0 %35
    %v37 = vsel %vm25, %v33, 0.0
    %38 = vadd.xlane.f32.xlu0 %v37
    %v39 = vpop.xlane.xlu0 %38
    %v40 = vrcp.pop 32.0
    %v41 = vmul.f32 %v36, %v40
    %v42 = vmul.f32 %v39, %v40
    %v43 = vsub.f32 %v32, %v41
    %v44 = vsub.f32 %v33, %v42
    %v45 = vmul.f32 %v43, %v43
    %v46 = vmul.f32 %v44, %v44
    %v47 = vsel %vm25, %v45, 0.0
    %48 = vadd.xlane.f32.xlu0 %v47
    %v49 = vpop.xlane.xlu0 %48
    %v50 = vsel %vm25, %v46, 0.0
    %51 = vadd.xlane.f32.xlu0 %v50
    %v52 = vpop.xlane.xlu0 %51
    %v53 = vmul.f32 %v49, %v40
    %v54 = vmul.f32 %v52, %v40
    %v55 = vadd.f32 %v53, 1e-05
    %v56 = vadd.f32 %v54, 1e-05
    %v57 = vrsqrt.pop %v55
    %v58 = vrsqrt.pop %v56
    %v59 = vmul.f32 %v43, %v57
    %v60 = vmul.f32 %v44, %v58
    %v62 = vlaneseq
    %v63 = vshrl.u32 %v62, 7
    %v64 = vsub.s32 0, %v63
    %v65 = vrot.slane %v30, %v64
    %v67 = vmul.f32 %v59, %v65
    %v68 = vmul.f32 %v60, %v65
    %v70 = vlaneseq
    %v71 = vshrl.u32 %v70, 7
    %v72 = vsub.s32 0, %v71
    %v73 = vrot.slane %v31, %v72
    %v75 = vadd.f32 %v67, %v73
    %v76 = vadd.f32 %v68, %v73
    %v77 = vpack.c.bf16 %v76, %v75
    %78 = vst.msk [vmem:[#allocation3] sm:$0xff] %vm25, %v77
  $region25: #{text_encoder_forward.12} parent=0 // pred_fallthru
    _
  %v79 = vld [vmem:[#allocation3] sm:$0xff]
  %v80 = vld [vmem:[%s3] sm:$0xf]
  %v81 = vld [vmem:[%s3 + $0x4] sm:$0xf]
  %v82 = vld [vmem:[%s3 + $0x8] sm:$0xf]
  %v83 = vld [vmem:[%s3 + $0xc] sm:$0xf]
  %v88 = vunpack.c.l.b16 %v80
  %v89 = vunpack.c.l.b16 %v81
  %v90 = vunpack.c.l.b16 %v82
  %v91 = vunpack.c.l.b16 %v83
  %v92 = vpack.c.b16 %v89, %v88
  %v93 = vpack.c.b16 %v91, %v90
  %vm96 = vcmask 261120
  %v98 = vsel %vm96, %v79, 0
  %100 = vmatprep.subr.bf16.mxu0 0
  %101 = vmatpush1.bf16.msra.mxu0 %v92
  %102 = vmatprep.subr.bf16.mxu0 0
  %103 = vmatpush1.bf16.msra.mxu0 %v93
  %104 = vmatprep.subr.bf16.mxu0 0
  %105 = vmatpush1.bf16.msra.mxu0 0
  %106 = vmatprep.subr.bf16.mxu0 0
  %107 = vmatpush1.bf16.msra.mxu0 0
  %108 = vmatprep.subr.bf16.mxu0 0
  %109 = vmatpush1.bf16.msra.mxu0 0
  %110 = vmatprep.subr.bf16.mxu0 0
  %111 = vmatpush1.bf16.msra.mxu0 0
  %112 = vmatprep.subr.bf16.mxu0 0
  %113 = vmatpush1.bf16.msra.mxu0 0
  %114 = vmatprep.subr.bf16.mxu0 0
  %115 = vmatpush1.bf16.msra.mxu0 0
  %116 = vmatprep.subr.bf16.mxu0 0
  %117 = vmatpush1.bf16.msra.mxu0 0
  %118 = vmatprep.subr.bf16.mxu0 0
  %119 = vmatpush1.bf16.msra.mxu0 0
  %120 = vmatprep.subr.bf16.mxu0 0
  %121 = vmatpush1.bf16.msra.mxu0 0
  %122 = vmatprep.subr.bf16.mxu0 0
  %123 = vmatpush1.bf16.msra.mxu0 0
  %124 = vmatprep.subr.bf16.mxu0 0
  %125 = vmatpush1.bf16.msra.mxu0 0
  %126 = vmatprep.subr.bf16.mxu0 0
  %127 = vmatpush1.bf16.msra.mxu0 0
  %128 = vmatprep.subr.bf16.mxu0 0
  %129 = vmatpush1.bf16.msra.mxu0 0
  %130 = vmatprep.subr.bf16.mxu0 0
  %131 = vmatpush1.bf16.msra.mxu0 0
  %132 = vmatprep.mubr.bf16.mxu0 0
  %133 = vmatmul.mubr.bf16.gmra.mrb[0].mxu0 %v98
  %v134 = vpop.f32.mrb[0].mxu0
  %v135 = vadd.f32 0.0, %v134
  %v136 = vpop.f32.mrb[0].mxu0
  %v137 = vpop.f32.mrb[0].mxu0
  %v138 = vadd.f32 0.0, %v137
  %v139 = vpop.f32.mrb[0].mxu0
  %140 = vdwg.mxu0
  %v141 = vmul.f32 %v135, 0.5
  %v142 = vmul.f32 %v138, 0.5
  %v143 = vmul.f32 %v135, 0.70710677
  %v144 = vmul.f32 %v138, 0.70710677
  %v145 = verf.f32.pop %v143
  %v146 = verf.f32.pop %v144
  %v147 = vadd.f32 %v145, 1.0
  %v148 = vadd.f32 %v146, 1.0
  %v149 = vmul.f32 %v141, %v147
  %v150 = vmul.f32 %v142, %v148
  %v151 = vld [vmem:[#allocation2] sm:$0xff]
  %v152 = vld [vmem:[#allocation2 + $0x8] sm:$0xff]
  %v153 = vpack.c.bf16 %v150, %v149
  %v154 = vld [vmem:[%s4] sm:$0xf]
  %v155 = vld [vmem:[%s4 + $0x4] sm:$0xf]
  %v156 = vld [vmem:[%s4 + $0x8] sm:$0xf]
  %v157 = vld [vmem:[%s4 + $0xc] sm:$0xf]
  %v158 = vld [vmem:[%s4 + $0x10] sm:$0xf]
  %v159 = vld [vmem:[%s4 + $0x14] sm:$0xf]
  %v160 = vld [vmem:[%s4 + $0x18] sm:$0xf]
  %v161 = vld [vmem:[%s4 + $0x1c] sm:$0xf]
  %v162 = vld [vmem:[%s4 + $0x20] sm:$0xf]
  %v163 = vld [vmem:[%s4 + $0x24] sm:$0xf]
  %v164 = vld [vmem:[%s4 + $0x28] sm:$0xf]
  %v165 = vld [vmem:[%s4 + $0x2c] sm:$0xf]
  %v166 = vld [vmem:[%s4 + $0x30] sm:$0xf]
  %v167 = vld [vmem:[%s4 + $0x34] sm:$0xf]
  %v168 = vld [vmem:[%s4 + $0x38] sm:$0xf]
  %v169 = vld [vmem:[%s4 + $0x3c] sm:$0xf]
  %v186 = vunpack.c.l.b16 %v154
  %v187 = vunpack.c.l.b16 %v155
  %v188 = vunpack.c.l.b16 %v156
  %v189 = vunpack.c.l.b16 %v157
  %v190 = vunpack.c.l.b16 %v158
  %v191 = vunpack.c.l.b16 %v159
  %v192 = vunpack.c.l.b16 %v160
  %v193 = vunpack.c.l.b16 %v161
  %v194 = vunpack.c.l.b16 %v162
  %v195 = vunpack.c.l.b16 %v163
  %v196 = vunpack.c.l.b16 %v164
  %v197 = vunpack.c.l.b16 %v165
  %v198 = vunpack.c.l.b16 %v166
  %v199 = vunpack.c.l.b16 %v167
  %v200 = vunpack.c.l.b16 %v168
  %v201 = vunpack.c.l.b16 %v169
  %v202 = vpack.c.b16 %v187, %v186
  %v203 = vpack.c.b16 %v189, %v188
  %v204 = vpack.c.b16 %v191, %v190
  %v205 = vpack.c.b16 %v193, %v192
  %v206 = vpack.c.b16 %v195, %v194
  %v207 = vpack.c.b16 %v197, %v196
  %v208 = vpack.c.b16 %v199, %v198
  %v209 = vpack.c.b16 %v201, %v200
  %218 = vmatprep.subr.bf16.mxu0 0
  %219 = vmatpush1.bf16.msra.mxu0 %v202
  %220 = vmatprep.subr.bf16.mxu0 0
  %221 = vmatpush1.bf16.msra.mxu0 %v203
  %222 = vmatprep.subr.bf16.mxu0 0
  %223 = vmatpush1.bf16.msra.mxu0 %v204
  %224 = vmatprep.subr.bf16.mxu0 0
  %225 = vmatpush1.bf16.msra.mxu0 %v205
  %226 = vmatprep.subr.bf16.mxu0 0
  %227 = vmatpush1.bf16.msra.mxu0 %v206
  %228 = vmatprep.subr.bf16.mxu0 0
  %229 = vmatpush1.bf16.msra.mxu0 %v207
  %230 = vmatprep.subr.bf16.mxu0 0
  %231 = vmatpush1.bf16.msra.mxu0 %v208
  %232 = vmatprep.subr.bf16.mxu0 0
  %233 = vmatpush1.bf16.msra.mxu0 %v209
  %234 = vmatprep.subr.bf16.mxu0 0
  %235 = vmatpush1.bf16.msra.mxu0 0
  %236 = vmatprep.subr.bf16.mxu0 0
  %237 = vmatpush1.bf16.msra.mxu0 0
  %238 = vmatprep.subr.bf16.mxu0 0
  %239 = vmatpush1.bf16.msra.mxu0 0
  %240 = vmatprep.subr.bf16.mxu0 0
  %241 = vmatpush1.bf16.msra.mxu0 0
  %242 = vmatprep.subr.bf16.mxu0 0
  %243 = vmatpush1.bf16.msra.mxu0 0
  %244 = vmatprep.subr.bf16.mxu0 0
  %245 = vmatpush1.bf16.msra.mxu0 0
  %246 = vmatprep.subr.bf16.mxu0 0
  %247 = vmatpush1.bf16.msra.mxu0 0
  %248 = vmatprep.subr.bf16.mxu0 0
  %249 = vmatpush1.bf16.msra.mxu0 0
  %250 = vmatprep.mubr.bf16.mxu0 0
  %251 = vmatmul.mubr.bf16.gmra.mrb[0].mxu0 %v153
  %v252 = vpop.f32.mrb[0].mxu0
  %v253 = vadd.f32 0.0, %v252
  %v254 = vpop.f32.mrb[0].mxu0
  %v255 = vpop.f32.mrb[0].mxu0
  %v256 = vadd.f32 0.0, %v255
  %v257 = vpop.f32.mrb[0].mxu0
  %258 = vdwg.mxu0
  %v259 = vadd.f32 %v151, %v253
  %v260 = vadd.f32 %v152, %v256
  %261 = vst.msk [vmem:[#allocation2] sm:$0xff] %vm96, %v259
  %262 = vst.msk [vmem:[#allocation2 + $0x8] sm:$0xff] %vm96, %v260
  // Predicated region
  $region26: #{text_encoder_forward.12} parent=0 // pred_check
    %p263 = pneg %p21
  $region27: #{text_encoder_forward.12} parent=0 // pred_check_branch
    %265 = sbr.rel (%p263) target = $region29
  $region28: #{text_encoder_forward.12} parent=0 // pred_region
    %v266 = vld [vmem:[%s0] sm:$0xf]
    %v267 = vld [vmem:[%s0 + $0x4] sm:$0xf]
    %v268 = vunpack.c.l.bf16 %v266
    %v269 = vunpack.c.l.bf16 %v267
    %v270 = vld [vmem:[#allocation2] sm:$0xff]
    %v271 = vld [vmem:[#allocation2 + $0x8] sm:$0xff]
    %v272 = vadd.f32 %v268, %v270
    %v273 = vadd.f32 %v269, %v271
    %v274 = vpack.c.bf16 %v273, %v272
    %v276 = vunpack.c.l.b16 %v274
    %v277 = vunpack.c.h.b16 %v274
    %v278 = vpack.c.b16 %v276, %v276
    %v279 = vpack.c.b16 %v277, %v277
    %vm282 = vcmask 257024
    %283 = vst.msk [vmem:[%s5] sm:$0xf] %vm282, %v278
    %284 = vst.msk [vmem:[%s5 + $0x4] sm:$0xf] %vm282, %v279
  $region29: #{text_encoder_forward.12} parent=0 // pred_fallthru
    _
  // Predicated region
  $region30: #{text_encoder_forward.12} parent=0 // pred_check
    _
  $region31: #{text_encoder_forward.12} parent=0 // pred_check_branch
    %286 = sbr.rel (0) target = $region33
  $region32: #{text_encoder_forward.12} parent=0 // pred_region
    _
  $region33: #{text_encoder_forward.12} parent=0 // pred_fallthru
    _
  // Predicated region
  $region34: #{text_encoder_forward.12} parent=0 // pred_check
    _
  $region35: #{text_encoder_forward.12} parent=0 // pred_check_branch
    %288 = sbr.rel (0) target = $region37
  $region36: #{text_encoder_forward.12} parent=0 // pred_region
    _
  $region37: #{text_encoder_forward.12} parent=0 // pred_fallthru
    _

// kernel: text_encoder_forward.17
$region0: #{text_encoder_forward.17}
  #allocation0 [shape = 'u32[]', space=smem, size = 0x4, offset = 0x4, fixed_abs, tag = 'smem constant byte address 0x4 - core index']
  #allocation1 [shape = 'u32[144,128]{1,0:T(1,128)}', space=vmem, size = 0x12000, scoped, tag = 'internal scratch']
  %s0 = inlined_call_operand.vmem [shape: bf16[16,32], index: 0, kind: input, shape index: {}]
  %s1 = inlined_call_operand.vmem [shape: f32[1,32], index: 1, kind: input, shape index: {}]
  %s2 = inlined_call_operand.vmem [shape: f32[1,32], index: 2, kind: input, shape index: {}]
  %s3 = inlined_call_operand.hbm [shape: f32[16,32], index: 3, kind: output, shape index: {}]
  %s4 = sld [smem:[#allocation0]]
  $region22: #{text_encoder_forward.17} parent=0
    _
  %s6 = ssub.s32 1, %s4
  %s7 = scalar_select 0, %s6, %s4
  $region1: #{text_encoder_forward.17} parent=0
    #allocation2 [shape = 'u8[8192]{0}', space=vmem, size = 0x2000, scoped, tag = 'output window, operand 0, single buffered']
    #allocation3 [shape = 's32[1]{0}', space=sflag, size = 0x4, scoped, tag = 'scoped memory for text_encoder_forward.17']
    %8 = vsyncpa [#allocation3], 0
    // Predicated region
    $region2: #{text_encoder_forward.17} parent=1 // pred_check
      _
    $region3: #{text_encoder_forward.17} parent=1 // pred_check_branch
      %10 = sbr.rel (0) target = $region5
    $region4: #{text_encoder_forward.17} parent=1 // pred_region
      _
    $region5: #{text_encoder_forward.17} parent=1 // pred_fallthru
      _
    // Predicated region
    $region6: #{text_encoder_forward.17} parent=1 // pred_check
      _
    $region7: #{text_encoder_forward.17} parent=1 // pred_check_branch
      %12 = sbr.rel (0) target = $region9
    $region8: #{text_encoder_forward.17} parent=1 // pred_region
      _
    $region9: #{text_encoder_forward.17} parent=1 // pred_fallthru
      _
    // Predicated region
    $region10: #{text_encoder_forward.17} parent=1 // pred_check
      _
    $region11: #{text_encoder_forward.17} parent=1 // pred_check_branch
      %14 = sbr.rel (0) target = $region13
    $region12: #{text_encoder_forward.17} parent=1 // pred_region
      _
    $region13: #{text_encoder_forward.17} parent=1 // pred_fallthru
      _
    %v15 = vld [vmem:[%s0] sm:$0xf]
    %v16 = vld [vmem:[%s0 + $0x4] sm:$0xf]
    %v17 = vld [vmem:[%s1] sm:$0x1]
    %v18 = vld [vmem:[%s2] sm:$0x1]
    %v19 = vunpack.c.l.bf16 %v15
    %v20 = vunpack.c.l.bf16 %v16
    %vm21 = vcmask 261120
    %v22 = vsel %vm21, %v19, 0.0
    %23 = vadd.xlane.f32.xlu0 %v22
    %v24 = vpop.xlane.xlu0 %23
    %v25 = vsel %vm21, %v20, 0.0
    %26 = vadd.xlane.f32.xlu0 %v25
    %v27 = vpop.xlane.xlu0 %26
    %v28 = vrcp.pop 32.0
    %v29 = vmul.f32 %v24, %v28
    %v30 = vmul.f32 %v27, %v28
    %v31 = vsub.f32 %v19, %v29
    %v32 = vsub.f32 %v20, %v30
    %v33 = vmul.f32 %v31, %v31
    %v34 = vmul.f32 %v32, %v32
    %v35 = vsel %vm21, %v33, 0.0
    %36 = vadd.xlane.f32.xlu0 %v35
    %v37 = vpop.xlane.xlu0 %36
    %v38 = vsel %vm21, %v34, 0.0
    %39 = vadd.xlane.f32.xlu0 %v38
    %v40 = vpop.xlane.xlu0 %39
    %v41 = vmul.f32 %v37, %v28
    %v42 = vmul.f32 %v40, %v28
    %v43 = vadd.f32 %v41, 1e-05
    %v44 = vadd.f32 %v42, 1e-05
    %v45 = vrsqrt.pop %v43
    %v46 = vrsqrt.pop %v44
    %v47 = vmul.f32 %v31, %v45
    %v48 = vmul.f32 %v32, %v46
    %v50 = vlaneseq
    %v51 = vshrl.u32 %v50, 7
    %v52 = vsub.s32 0, %v51
    %v53 = vrot.slane %v17, %v52
    %v55 = vmul.f32 %v47, %v53
    %v56 = vmul.f32 %v48, %v53
    %v58 = vlaneseq
    %v59 = vshrl.u32 %v58, 7
    %v60 = vsub.s32 0, %v59
    %v61 = vrot.slane %v18, %v60
    %v63 = vadd.f32 %v55, %v61
    %v64 = vadd.f32 %v56, %v61
    %65 = vst.msk [vmem:[#allocation2] sm:$0xff] %vm21, %v63
    %66 = vst.msk [vmem:[#allocation2 + $0x8] sm:$0xff] %vm21, %v64
    // Predicated region
    $region14: #{text_encoder_forward.17} parent=1 // pred_check
      _
    $region15: #{text_encoder_forward.17} parent=1 // pred_check_branch
      %68 = sbr.rel (0) target = $region17
    $region16: #{text_encoder_forward.17} parent=1 // pred_region
      %s70 = ssub.s32 256, 256
      %71 = vsyncadd [#allocation3], %s70
      %s72 = sshll.u32 [#allocation2], 4
      %s73 = int_to_ptr.vmem [resolvable:$true] %s72
      %78 = dma.vmem_to_hbm [thread:$0]  %s73, 256, %s3, [#allocation3], 128, 128, 8
    $region17: #{text_encoder_forward.17} parent=1 // pred_fallthru
      _
    // Predicated region
    $region18: #{text_encoder_forward.17} parent=1 // pred_check
      _
    $region19: #{text_encoder_forward.17} parent=1 // pred_check_branch
      %80 = sbr.rel (0) target = $region21
    $region20: #{text_encoder_forward.17} parent=1 // pred_region
      %81 = dma.done [#allocation3], 256
    $region21: #{text_encoder_forward.17} parent=1 // pred_fallthru
      _
    %82 = vsyncpa [#allocation3], 1

</llo_original>
